<compile_context>
chip_gen: v6e
topology: v6e:2x2x1
jax: 0.10.0
libtpu: 0.0.40
codegen_flags: <defaults>
</compile_context>

<pallas_src>
import numpy as np

import jax
import jax.numpy as jnp
from jax import lax
from jax.experimental import pallas as pl
from jax.experimental.pallas import tpu as pltpu


def _downsample_kernel(ee_ref, eo_ref, oe_ref, oo_ref, bee_ref, beo_ref,
                       w_ref, b_ref, o_ref):
    # ee_ref : (Cin, Re, Wo+1)  even rows / even cols of the padded input
    # eo_ref : (Cin, Re, Wo)    even rows / odd  cols
    # oe_ref : (Cin, T,  Wo+1)  odd  rows / even cols
    # oo_ref : (Cin, T,  Wo)    odd  rows / odd  cols
    # bee_ref: (Cin, Wo+1)      boundary even/even row (first even row of next stripe)
    # beo_ref: (Cin, Wo)        boundary even/odd  row
    # w_ref  : (Cout, 9*Cin)    conv weight, flattened in (kh, kw, cin) order
    # b_ref  : (Cout, 1)        bias (f32)
    # o_ref  : (Cout, T, Wo)    NCHW output stripe
    cout, t_rows, wo = o_ref.shape

    w = w_ref[...]
    bias = b_ref[...].astype(jnp.float32)
    bee = bee_ref[...]
    beo = beo_ref[...]

    def even_row(ref, boundary, idx):
        # Rows 0..Re-1 live in this stripe's block; the row just past the stripe
        # (needed by the kh=2 taps of the last output row) is the boundary input.
        if idx < ref.shape[1]:
            return ref[:, idx, :]
        return boundary

    for t in range(t_rows):                      # static unroll (<= 32 rows)
        ee0 = even_row(ee_ref, bee, t)
        ee1 = even_row(ee_ref, bee, t + 1)
        eo0 = even_row(eo_ref, beo, t)
        eo1 = even_row(eo_ref, beo, t + 1)
        oe0 = oe_ref[:, t, :]
        oo0 = oo_ref[:, t, :]
        # One output row's im2col block, ordered (kh, kw, cin) to match w_ref.
        col = jnp.concatenate(
            [
                ee0[:, :wo], eo0, ee0[:, 1:wo + 1],      # kh = 0, kw = 0,1,2
                oe0[:, :wo], oo0, oe0[:, 1:wo + 1],      # kh = 1
                ee1[:, :wo], eo1, ee1[:, 1:wo + 1],      # kh = 2
            ],
            axis=0,
        )                                                # (9*Cin, Wo)
        acc = jnp.dot(w, col, preferred_element_type=jnp.float32) + bias
        o_ref[:, t, :] = acc.astype(o_ref.dtype)


def _pick_tile_rows(Ho, Cin, Cout, Wo, in_itemsize, out_itemsize,
                    budget_bytes=16 * 1024 * 1024, max_rows=32):
    """Largest multiple-of-8 output-row stripe fitting the VMEM budget
    (4 parity planes + output double-buffered, weight panel double-buffered)."""
    if Ho < 8:
        return Ho
    cand = min(Ho - Ho % 8, max_rows)
    while cand > 8:
        need = (2 * Cin * cand * (4 * Wo + 2) * in_itemsize
                + 2 * Cout * cand * Wo * out_itemsize
                + 2 * 9 * Cin * Cout * in_itemsize)
        if need <= budget_bytes:
            break
        cand -= 8
    return cand


def downsample(x_nchw, weight_oihw, bias, *, compute_dtype=None):
    """Pallas TPU implementation of Downsample.forward (pad (0,1,0,1) + 3x3/s2 conv).

    x_nchw:      (B, Cin, H, W)
    weight_oihw: (Cout, Cin, 3, 3)
    bias:        (Cout,)
    compute_dtype: MXU operand dtype (e.g. jnp.bfloat16 on v6e/v7x); accumulation
                   is always f32. Defaults to x_nchw.dtype.
    returns:     (B, Cout, Ho, Wo) in x_nchw.dtype (NCHW, same as PyTorch).
    """
    B, Cin, H, W = x_nchw.shape
    Cout = weight_oihw.shape[0]
    if compute_dtype is None:
        compute_dtype = x_nchw.dtype
    out_dtype = x_nchw.dtype

    Hp, Wp = H + 1, W + 1
    Ho = (Hp - 3) // 2 + 1
    Wo = (Wp - 3) // 2 + 1

    # ---- XLA glue: zero pad + parity deinterleave (single ~1x copy, NCHW kept,
    # ---- no 2.25x im2col, no layout transposes).
    xp = jnp.pad(x_nchw, ((0, 0), (0, 0), (0, 1), (0, 1))).astype(compute_dtype)
    ee = xp[:, :, 0::2, 0::2][:, :, :Ho + 1, :Wo + 1]    # (B, Cin, Ho+1, Wo+1)
    eo = xp[:, :, 0::2, 1::2][:, :, :Ho + 1, :Wo]        # (B, Cin, Ho+1, Wo)
    oe = xp[:, :, 1::2, 0::2][:, :, :Ho, :Wo + 1]        # (B, Cin, Ho,   Wo+1)
    oo = xp[:, :, 1::2, 1::2][:, :, :Ho, :Wo]            # (B, Cin, Ho,   Wo)

    # ---- Output-row stripe tiling.
    T = _pick_tile_rows(Ho, Cin, Cout, Wo,
                        jnp.dtype(compute_dtype).itemsize,
                        jnp.dtype(out_dtype).itemsize)
    n_tiles = -(-Ho // T)
    if B * n_tiles < 2 and T > 8:            # keep >=2 grid steps for v7x megacore
        T = max(8, (T // 2) // 8 * 8)
        n_tiles = -(-Ho // T)
    # Ho < 8 fallback: take the full (Ho+1)-row even planes as one block.
    e_rows_block = T if T % 8 == 0 else Ho + 1

    # Boundary even rows (row (i+1)*T of ee/eo) for each stripe — tiny side input.
    bidx = np.minimum((np.arange(n_tiles) + 1) * T, Ho).astype(np.int32)
    bee = jnp.moveaxis(jnp.take(ee, bidx, axis=2), 2, 1)   # (B, n_tiles, Cin, Wo+1)
    beo = jnp.moveaxis(jnp.take(eo, bidx, axis=2), 2, 1)   # (B, n_tiles, Cin, Wo)

    # Weight flattened so its columns follow the kernel's (kh, kw, cin) ordering.
    wflat = jnp.transpose(weight_oihw, (0, 2, 3, 1)).reshape(Cout, 9 * Cin)
    wflat = wflat.astype(compute_dtype)
    b2 = bias.astype(jnp.float32).reshape(Cout, 1)

    grid = (B, n_tiles)
    in_specs = [
        pl.BlockSpec((None, Cin, e_rows_block, Wo + 1), lambda b, i: (b, 0, i, 0)),
        pl.BlockSpec((None, Cin, e_rows_block, Wo), lambda b, i: (b, 0, i, 0)),
        pl.BlockSpec((None, Cin, T, Wo + 1), lambda b, i: (b, 0, i, 0)),
        pl.BlockSpec((None, Cin, T, Wo), lambda b, i: (b, 0, i, 0)),
        pl.BlockSpec((None, None, Cin, Wo + 1), lambda b, i: (b, i, 0, 0)),
        pl.BlockSpec((None, None, Cin, Wo), lambda b, i: (b, i, 0, 0)),
        pl.BlockSpec((Cout, 9 * Cin), lambda b, i: (0, 0)),
        pl.BlockSpec((Cout, 1), lambda b, i: (0, 0)),
    ]
    out_specs = pl.BlockSpec((None, Cout, T, Wo), lambda b, i: (b, 0, i, 0))

    in_item = jnp.dtype(compute_dtype).itemsize
    flops = 2 * 9 * Cin * Cout * B * Ho * Wo
    bytes_accessed = int(
        (ee.size + eo.size + oe.size + oo.size + bee.size + beo.size + wflat.size)
        * in_item + B * Cout * Ho * Wo * jnp.dtype(out_dtype).itemsize)

    return pl.pallas_call(
        _downsample_kernel,
        out_shape=jax.ShapeDtypeStruct((B, Cout, Ho, Wo), out_dtype),
        grid_spec=pltpu.PrefetchScalarGridSpec(
            num_scalar_prefetch=0,
            grid=grid,
            in_specs=in_specs,
            out_specs=out_specs,
        ),
        compiler_params=pltpu.CompilerParams(
            dimension_semantics=("parallel", "parallel"),
            vmem_limit_bytes=32 * 1024 * 1024,
        ),
        cost_estimate=pl.CostEstimate(
            flops=flops, transcendentals=0, bytes_accessed=bytes_accessed),
    )(ee, eo, oe, oo, bee, beo, wflat, b2)


if __name__ == "__main__":
    key = jax.random.PRNGKey(0)
    kx, kw, kb = jax.random.split(key, 3)

    B, C, H, W = 2, 4, 16, 16
    x = jax.random.normal(kx, (B, C, H, W), dtype=jnp.float32)

    # Deterministic synthetic Conv2d(C, C, 3) parameters.
    fan_in = C * 3 * 3
    weight = jax.random.normal(kw, (C, C, 3, 3), dtype=jnp.float32) / jnp.sqrt(fan_in)
    bias = jax.random.normal(kb, (C,), dtype=jnp.float32) * 0.01

    # Reference: XLA conv with identical pad / stride semantics.
    x_pad = jnp.pad(x, ((0, 0), (0, 0), (0, 1), (0, 1)))
    ref = lax.conv_general_dilated(
        x_pad, weight, window_strides=(2, 2), padding="VALID",
        dimension_numbers=("NCHW", "OIHW", "NCHW"),
    ) + bias.reshape(1, -1, 1, 1)

    fn = jax.jit(downsample, static_argnames=("compute_dtype",))

    # f32 path: matches the PyTorch module's numerics.
    out = jax.block_until_ready(fn(x, weight, bias))
    assert out.shape == (B, C, 8, 8), out.shape
    assert jnp.allclose(out, ref, atol=1e-5, rtol=1e-5), \
        float(jnp.max(jnp.abs(out - ref)))

    # bf16-operand path (v6e/v7x MXU-native, f32 accumulation): looser tolerance.
    out_bf16 = jax.block_until_ready(fn(x, weight, bias, compute_dtype=jnp.bfloat16))
    assert out_bf16.shape == (B, C, 8, 8), out_bf16.shape
    assert jnp.allclose(out_bf16, ref, atol=5e-2, rtol=5e-2), \
        float(jnp.max(jnp.abs(out_bf16 - ref)))

    print("KERNEL_OK")
</pallas_src>

<mosaic_0001>
module attributes {stable_mosaic.version = 11 : i64} {
  func.func @_downsample_kernel(%arg0: i32, %arg1: i32, %arg2: memref<1x4x8x9xf32, #tpu.memory_space<vmem>>, %arg3: memref<1x4x8x8xf32, #tpu.memory_space<vmem>>, %arg4: memref<1x4x8x9xf32, #tpu.memory_space<vmem>>, %arg5: memref<1x4x8x8xf32, #tpu.memory_space<vmem>>, %arg6: memref<1x1x4x9xf32, #tpu.memory_space<vmem>>, %arg7: memref<1x1x4x8xf32, #tpu.memory_space<vmem>>, %arg8: memref<4x36xf32, #tpu.memory_space<vmem>>, %arg9: memref<4x1xf32, #tpu.memory_space<vmem>>, %arg10: memref<1x4x8x8xf32, #tpu.memory_space<vmem>>) attributes {dimension_semantics = [#tpu.dimension_semantics<parallel>, #tpu.dimension_semantics<parallel>], iteration_bounds = array<i64: 2, 1>, scalar_prefetch = 0 : i64, scratch_operands = 0 : i64, tpu.core_type = #tpu.core_type<tc>, window_params = [{transform_indices = @transform_0, window_bounds = array<i64: 1, 4, 8, 9>}, {transform_indices = @transform_1, window_bounds = array<i64: 1, 4, 8, 8>}, {transform_indices = @transform_2, window_bounds = array<i64: 1, 4, 8, 9>}, {transform_indices = @transform_3, window_bounds = array<i64: 1, 4, 8, 8>}, {transform_indices = @transform_4, window_bounds = array<i64: 1, 1, 4, 9>}, {transform_indices = @transform_5, window_bounds = array<i64: 1, 1, 4, 8>}, {pipeline_mode = #tpu.pipeline_mode<synchronous>, transform_indices = @transform_6, window_bounds = array<i64: 4, 36>}, {pipeline_mode = #tpu.pipeline_mode<synchronous>, transform_indices = @transform_7, window_bounds = array<i64: 4, 1>}, {transform_indices = @transform_8, window_bounds = array<i64: 1, 4, 8, 8>}]} {
    %c0 = arith.constant 0 : index
    %c0_0 = arith.constant 0 : index
    %0 = vector.load %arg8[%c0, %c0_0] : memref<4x36xf32, #tpu.memory_space<vmem>>, vector<4x36xf32>
    %c0_1 = arith.constant 0 : index
    %c0_2 = arith.constant 0 : index
    %1 = vector.load %arg9[%c0_1, %c0_2] : memref<4x1xf32, #tpu.memory_space<vmem>>, vector<4x1xf32>
    %c0_3 = arith.constant 0 : index
    %c0_4 = arith.constant 0 : index
    %c0_5 = arith.constant 0 : index
    %c0_6 = arith.constant 0 : index
    %2 = vector.load %arg6[%c0_3, %c0_4, %c0_5, %c0_6] : memref<1x1x4x9xf32, #tpu.memory_space<vmem>>, vector<1x1x4x9xf32>
    %3 = vector.shape_cast %2 : vector<1x1x4x9xf32> to vector<4x9xf32>
    %c0_7 = arith.constant 0 : index
    %c0_8 = arith.constant 0 : index
    %c0_9 = arith.constant 0 : index
    %c0_10 = arith.constant 0 : index
    %4 = vector.load %arg7[%c0_7, %c0_8, %c0_9, %c0_10] : memref<1x1x4x8xf32, #tpu.memory_space<vmem>>, vector<1x1x4x8xf32>
    %5 = vector.shape_cast %4 : vector<1x1x4x8xf32> to vector<4x8xf32>
    %c0_11 = arith.constant 0 : index
    %c0_12 = arith.constant 0 : index
    %c0_13 = arith.constant 0 : index
    %c0_14 = arith.constant 0 : index
    %6 = vector.load %arg2[%c0_11, %c0_12, %c0_13, %c0_14] : memref<1x4x8x9xf32, #tpu.memory_space<vmem>>, vector<1x4x1x9xf32>
    %7 = vector.shape_cast %6 : vector<1x4x1x9xf32> to vector<4x9xf32>
    %c0_15 = arith.constant 0 : index
    %c0_16 = arith.constant 0 : index
    %c1 = arith.constant 1 : index
    %c0_17 = arith.constant 0 : index
    %8 = vector.load %arg2[%c0_15, %c0_16, %c1, %c0_17] : memref<1x4x8x9xf32, #tpu.memory_space<vmem>>, vector<1x4x1x9xf32>
    %9 = vector.shape_cast %8 : vector<1x4x1x9xf32> to vector<4x9xf32>
    %c0_18 = arith.constant 0 : index
    %c0_19 = arith.constant 0 : index
    %c0_20 = arith.constant 0 : index
    %c0_21 = arith.constant 0 : index
    %10 = vector.load %arg3[%c0_18, %c0_19, %c0_20, %c0_21] : memref<1x4x8x8xf32, #tpu.memory_space<vmem>>, vector<1x4x1x8xf32>
    %11 = vector.shape_cast %10 : vector<1x4x1x8xf32> to vector<4x8xf32>
    %c0_22 = arith.constant 0 : index
    %c0_23 = arith.constant 0 : index
    %c1_24 = arith.constant 1 : index
    %c0_25 = arith.constant 0 : index
    %12 = vector.load %arg3[%c0_22, %c0_23, %c1_24, %c0_25] : memref<1x4x8x8xf32, #tpu.memory_space<vmem>>, vector<1x4x1x8xf32>
    %13 = vector.shape_cast %12 : vector<1x4x1x8xf32> to vector<4x8xf32>
    %c0_26 = arith.constant 0 : index
    %c0_27 = arith.constant 0 : index
    %c0_28 = arith.constant 0 : index
    %c0_29 = arith.constant 0 : index
    %14 = vector.load %arg4[%c0_26, %c0_27, %c0_28, %c0_29] : memref<1x4x8x9xf32, #tpu.memory_space<vmem>>, vector<1x4x1x9xf32>
    %15 = vector.shape_cast %14 : vector<1x4x1x9xf32> to vector<4x9xf32>
    %c0_30 = arith.constant 0 : index
    %c0_31 = arith.constant 0 : index
    %c0_32 = arith.constant 0 : index
    %c0_33 = arith.constant 0 : index
    %16 = vector.load %arg5[%c0_30, %c0_31, %c0_32, %c0_33] : memref<1x4x8x8xf32, #tpu.memory_space<vmem>>, vector<1x4x1x8xf32>
    %17 = vector.shape_cast %16 : vector<1x4x1x8xf32> to vector<4x8xf32>
    %18 = vector.extract_strided_slice %7 {offsets = [0, 0], sizes = [4, 8], strides = [1, 1]} : vector<4x9xf32> to vector<4x8xf32>
    %19 = vector.extract_strided_slice %7 {offsets = [0, 1], sizes = [4, 8], strides = [1, 1]} : vector<4x9xf32> to vector<4x8xf32>
    %20 = vector.extract_strided_slice %15 {offsets = [0, 0], sizes = [4, 8], strides = [1, 1]} : vector<4x9xf32> to vector<4x8xf32>
    %21 = vector.extract_strided_slice %15 {offsets = [0, 1], sizes = [4, 8], strides = [1, 1]} : vector<4x9xf32> to vector<4x8xf32>
    %22 = vector.extract_strided_slice %9 {offsets = [0, 0], sizes = [4, 8], strides = [1, 1]} : vector<4x9xf32> to vector<4x8xf32>
    %23 = vector.extract_strided_slice %9 {offsets = [0, 1], sizes = [4, 8], strides = [1, 1]} : vector<4x9xf32> to vector<4x8xf32>
    %24 = tpu.concatenate %18, %11, %19, %20, %17, %21, %22, %13, %23 in 0 : vector<4x8xf32>, vector<4x8xf32>, vector<4x8xf32>, vector<4x8xf32>, vector<4x8xf32>, vector<4x8xf32>, vector<4x8xf32>, vector<4x8xf32>, vector<4x8xf32> -> vector<36x8xf32>
    %cst = arith.constant dense<0.000000e+00> : vector<4x8xf32>
    %25 = tpu.matmul %0, %24, %cst {dimension_numbers = #tpu.dot_dimension_numbers<[1], [0], [0], [1], [0, 0, 1, 1], [], []>} : vector<4x36xf32>, vector<36x8xf32>, vector<4x8xf32> -> vector<4x8xf32>
    %26 = vector.broadcast %1 : vector<4x1xf32> to vector<4x8xf32>
    %27 = arith.addf %25, %26 : vector<4x8xf32>
    %c0_34 = arith.constant 0 : index
    %c0_35 = arith.constant 0 : index
    %c0_36 = arith.constant 0 : index
    %c0_37 = arith.constant 0 : index
    %28 = vector.load %arg10[%c0_34, %c0_35, %c0_36, %c0_37] : memref<1x4x8x8xf32, #tpu.memory_space<vmem>>, vector<1x4x1x8xf32>
    %29 = vector.shape_cast %28 : vector<1x4x1x8xf32> to vector<4x8xf32>
    %30 = vector.shape_cast %27 : vector<4x8xf32> to vector<1x4x1x8xf32>
    tpu.vector_store %arg10[%c0_34, %c0_35, %c0_36, %c0_37], %30 {strides = array<i32>} : memref<1x4x8x8xf32, #tpu.memory_space<vmem>>, vector<1x4x1x8xf32>,
    %c0_38 = arith.constant 0 : index
    %c0_39 = arith.constant 0 : index
    %c1_40 = arith.constant 1 : index
    %c0_41 = arith.constant 0 : index
    %31 = vector.load %arg2[%c0_38, %c0_39, %c1_40, %c0_41] : memref<1x4x8x9xf32, #tpu.memory_space<vmem>>, vector<1x4x1x9xf32>
    %32 = vector.shape_cast %31 : vector<1x4x1x9xf32> to vector<4x9xf32>
    %c0_42 = arith.constant 0 : index
    %c0_43 = arith.constant 0 : index
    %c2 = arith.constant 2 : index
    %c0_44 = arith.constant 0 : index
    %33 = vector.load %arg2[%c0_42, %c0_43, %c2, %c0_44] : memref<1x4x8x9xf32, #tpu.memory_space<vmem>>, vector<1x4x1x9xf32>
    %34 = vector.shape_cast %33 : vector<1x4x1x9xf32> to vector<4x9xf32>
    %c0_45 = arith.constant 0 : index
    %c0_46 = arith.constant 0 : index
    %c1_47 = arith.constant 1 : index
    %c0_48 = arith.constant 0 : index
    %35 = vector.load %arg3[%c0_45, %c0_46, %c1_47, %c0_48] : memref<1x4x8x8xf32, #tpu.memory_space<vmem>>, vector<1x4x1x8xf32>
    %36 = vector.shape_cast %35 : vector<1x4x1x8xf32> to vector<4x8xf32>
    %c0_49 = arith.constant 0 : index
    %c0_50 = arith.constant 0 : index
    %c2_51 = arith.constant 2 : index
    %c0_52 = arith.constant 0 : index
    %37 = vector.load %arg3[%c0_49, %c0_50, %c2_51, %c0_52] : memref<1x4x8x8xf32, #tpu.memory_space<vmem>>, vector<1x4x1x8xf32>
    %38 = vector.shape_cast %37 : vector<1x4x1x8xf32> to vector<4x8xf32>
    %c0_53 = arith.constant 0 : index
    %c0_54 = arith.constant 0 : index
    %c1_55 = arith.constant 1 : index
    %c0_56 = arith.constant 0 : index
    %39 = vector.load %arg4[%c0_53, %c0_54, %c1_55, %c0_56] : memref<1x4x8x9xf32, #tpu.memory_space<vmem>>, vector<1x4x1x9xf32>
    %40 = vector.shape_cast %39 : vector<1x4x1x9xf32> to vector<4x9xf32>
    %c0_57 = arith.constant 0 : index
    %c0_58 = arith.constant 0 : index
    %c1_59 = arith.constant 1 : index
    %c0_60 = arith.constant 0 : index
    %41 = vector.load %arg5[%c0_57, %c0_58, %c1_59, %c0_60] : memref<1x4x8x8xf32, #tpu.memory_space<vmem>>, vector<1x4x1x8xf32>
    %42 = vector.shape_cast %41 : vector<1x4x1x8xf32> to vector<4x8xf32>
    %43 = vector.extract_strided_slice %32 {offsets = [0, 0], sizes = [4, 8], strides = [1, 1]} : vector<4x9xf32> to vector<4x8xf32>
    %44 = vector.extract_strided_slice %32 {offsets = [0, 1], sizes = [4, 8], strides = [1, 1]} : vector<4x9xf32> to vector<4x8xf32>
    %45 = vector.extract_strided_slice %40 {offsets = [0, 0], sizes = [4, 8], strides = [1, 1]} : vector<4x9xf32> to vector<4x8xf32>
    %46 = vector.extract_strided_slice %40 {offsets = [0, 1], sizes = [4, 8], strides = [1, 1]} : vector<4x9xf32> to vector<4x8xf32>
    %47 = vector.extract_strided_slice %34 {offsets = [0, 0], sizes = [4, 8], strides = [1, 1]} : vector<4x9xf32> to vector<4x8xf32>
    %48 = vector.extract_strided_slice %34 {offsets = [0, 1], sizes = [4, 8], strides = [1, 1]} : vector<4x9xf32> to vector<4x8xf32>
    %49 = tpu.concatenate %43, %36, %44, %45, %42, %46, %47, %38, %48 in 0 : vector<4x8xf32>, vector<4x8xf32>, vector<4x8xf32>, vector<4x8xf32>, vector<4x8xf32>, vector<4x8xf32>, vector<4x8xf32>, vector<4x8xf32>, vector<4x8xf32> -> vector<36x8xf32>
    %cst_61 = arith.constant dense<0.000000e+00> : vector<4x8xf32>
    %50 = tpu.matmul %0, %49, %cst_61 {dimension_numbers = #tpu.dot_dimension_numbers<[1], [0], [0], [1], [0, 0, 1, 1], [], []>} : vector<4x36xf32>, vector<36x8xf32>, vector<4x8xf32> -> vector<4x8xf32>
    %51 = vector.broadcast %1 : vector<4x1xf32> to vector<4x8xf32>
    %52 = arith.addf %50, %51 : vector<4x8xf32>
    %c0_62 = arith.constant 0 : index
    %c0_63 = arith.constant 0 : index
    %c1_64 = arith.constant 1 : index
    %c0_65 = arith.constant 0 : index
    %53 = vector.load %arg10[%c0_62, %c0_63, %c1_64, %c0_65] : memref<1x4x8x8xf32, #tpu.memory_space<vmem>>, vector<1x4x1x8xf32>
    %54 = vector.shape_cast %53 : vector<1x4x1x8xf32> to vector<4x8xf32>
    %55 = vector.shape_cast %52 : vector<4x8xf32> to vector<1x4x1x8xf32>
    tpu.vector_store %arg10[%c0_62, %c0_63, %c1_64, %c0_65], %55 {strides = array<i32>} : memref<1x4x8x8xf32, #tpu.memory_space<vmem>>, vector<1x4x1x8xf32>,
    %c0_66 = arith.constant 0 : index
    %c0_67 = arith.constant 0 : index
    %c2_68 = arith.constant 2 : index
    %c0_69 = arith.constant 0 : index
    %56 = vector.load %arg2[%c0_66, %c0_67, %c2_68, %c0_69] : memref<1x4x8x9xf32, #tpu.memory_space<vmem>>, vector<1x4x1x9xf32>
    %57 = vector.shape_cast %56 : vector<1x4x1x9xf32> to vector<4x9xf32>
    %c0_70 = arith.constant 0 : index
    %c0_71 = arith.constant 0 : index
    %c3 = arith.constant 3 : index
    %c0_72 = arith.constant 0 : index
    %58 = vector.load %arg2[%c0_70, %c0_71, %c3, %c0_72] : memref<1x4x8x9xf32, #tpu.memory_space<vmem>>, vector<1x4x1x9xf32>
    %59 = vector.shape_cast %58 : vector<1x4x1x9xf32> to vector<4x9xf32>
    %c0_73 = arith.constant 0 : index
    %c0_74 = arith.constant 0 : index
    %c2_75 = arith.constant 2 : index
    %c0_76 = arith.constant 0 : index
    %60 = vector.load %arg3[%c0_73, %c0_74, %c2_75, %c0_76] : memref<1x4x8x8xf32, #tpu.memory_space<vmem>>, vector<1x4x1x8xf32>
    %61 = vector.shape_cast %60 : vector<1x4x1x8xf32> to vector<4x8xf32>
    %c0_77 = arith.constant 0 : index
    %c0_78 = arith.constant 0 : index
    %c3_79 = arith.constant 3 : index
    %c0_80 = arith.constant 0 : index
    %62 = vector.load %arg3[%c0_77, %c0_78, %c3_79, %c0_80] : memref<1x4x8x8xf32, #tpu.memory_space<vmem>>, vector<1x4x1x8xf32>
    %63 = vector.shape_cast %62 : vector<1x4x1x8xf32> to vector<4x8xf32>
    %c0_81 = arith.constant 0 : index
    %c0_82 = arith.constant 0 : index
    %c2_83 = arith.constant 2 : index
    %c0_84 = arith.constant 0 : index
    %64 = vector.load %arg4[%c0_81, %c0_82, %c2_83, %c0_84] : memref<1x4x8x9xf32, #tpu.memory_space<vmem>>, vector<1x4x1x9xf32>
    %65 = vector.shape_cast %64 : vector<1x4x1x9xf32> to vector<4x9xf32>
    %c0_85 = arith.constant 0 : index
    %c0_86 = arith.constant 0 : index
    %c2_87 = arith.constant 2 : index
    %c0_88 = arith.constant 0 : index
    %66 = vector.load %arg5[%c0_85, %c0_86, %c2_87, %c0_88] : memref<1x4x8x8xf32, #tpu.memory_space<vmem>>, vector<1x4x1x8xf32>
    %67 = vector.shape_cast %66 : vector<1x4x1x8xf32> to vector<4x8xf32>
    %68 = vector.extract_strided_slice %57 {offsets = [0, 0], sizes = [4, 8], strides = [1, 1]} : vector<4x9xf32> to vector<4x8xf32>
    %69 = vector.extract_strided_slice %57 {offsets = [0, 1], sizes = [4, 8], strides = [1, 1]} : vector<4x9xf32> to vector<4x8xf32>
    %70 = vector.extract_strided_slice %65 {offsets = [0, 0], sizes = [4, 8], strides = [1, 1]} : vector<4x9xf32> to vector<4x8xf32>
    %71 = vector.extract_strided_slice %65 {offsets = [0, 1], sizes = [4, 8], strides = [1, 1]} : vector<4x9xf32> to vector<4x8xf32>
    %72 = vector.extract_strided_slice %59 {offsets = [0, 0], sizes = [4, 8], strides = [1, 1]} : vector<4x9xf32> to vector<4x8xf32>
    %73 = vector.extract_strided_slice %59 {offsets = [0, 1], sizes = [4, 8], strides = [1, 1]} : vector<4x9xf32> to vector<4x8xf32>
    %74 = tpu.concatenate %68, %61, %69, %70, %67, %71, %72, %63, %73 in 0 : vector<4x8xf32>, vector<4x8xf32>, vector<4x8xf32>, vector<4x8xf32>, vector<4x8xf32>, vector<4x8xf32>, vector<4x8xf32>, vector<4x8xf32>, vector<4x8xf32> -> vector<36x8xf32>
    %cst_89 = arith.constant dense<0.000000e+00> : vector<4x8xf32>
    %75 = tpu.matmul %0, %74, %cst_89 {dimension_numbers = #tpu.dot_dimension_numbers<[1], [0], [0], [1], [0, 0, 1, 1], [], []>} : vector<4x36xf32>, vector<36x8xf32>, vector<4x8xf32> -> vector<4x8xf32>
    %76 = vector.broadcast %1 : vector<4x1xf32> to vector<4x8xf32>
    %77 = arith.addf %75, %76 : vector<4x8xf32>
    %c0_90 = arith.constant 0 : index
    %c0_91 = arith.constant 0 : index
    %c2_92 = arith.constant 2 : index
    %c0_93 = arith.constant 0 : index
    %78 = vector.load %arg10[%c0_90, %c0_91, %c2_92, %c0_93] : memref<1x4x8x8xf32, #tpu.memory_space<vmem>>, vector<1x4x1x8xf32>
    %79 = vector.shape_cast %78 : vector<1x4x1x8xf32> to vector<4x8xf32>
    %80 = vector.shape_cast %77 : vector<4x8xf32> to vector<1x4x1x8xf32>
    tpu.vector_store %arg10[%c0_90, %c0_91, %c2_92, %c0_93], %80 {strides = array<i32>} : memref<1x4x8x8xf32, #tpu.memory_space<vmem>>, vector<1x4x1x8xf32>,
    %c0_94 = arith.constant 0 : index
    %c0_95 = arith.constant 0 : index
    %c3_96 = arith.constant 3 : index
    %c0_97 = arith.constant 0 : index
    %81 = vector.load %arg2[%c0_94, %c0_95, %c3_96, %c0_97] : memref<1x4x8x9xf32, #tpu.memory_space<vmem>>, vector<1x4x1x9xf32>
    %82 = vector.shape_cast %81 : vector<1x4x1x9xf32> to vector<4x9xf32>
    %c0_98 = arith.constant 0 : index
    %c0_99 = arith.constant 0 : index
    %c4 = arith.constant 4 : index
    %c0_100 = arith.constant 0 : index
    %83 = vector.load %arg2[%c0_98, %c0_99, %c4, %c0_100] : memref<1x4x8x9xf32, #tpu.memory_space<vmem>>, vector<1x4x1x9xf32>
    %84 = vector.shape_cast %83 : vector<1x4x1x9xf32> to vector<4x9xf32>
    %c0_101 = arith.constant 0 : index
    %c0_102 = arith.constant 0 : index
    %c3_103 = arith.constant 3 : index
    %c0_104 = arith.constant 0 : index
    %85 = vector.load %arg3[%c0_101, %c0_102, %c3_103, %c0_104] : memref<1x4x8x8xf32, #tpu.memory_space<vmem>>, vector<1x4x1x8xf32>
    %86 = vector.shape_cast %85 : vector<1x4x1x8xf32> to vector<4x8xf32>
    %c0_105 = arith.constant 0 : index
    %c0_106 = arith.constant 0 : index
    %c4_107 = arith.constant 4 : index
    %c0_108 = arith.constant 0 : index
    %87 = vector.load %arg3[%c0_105, %c0_106, %c4_107, %c0_108] : memref<1x4x8x8xf32, #tpu.memory_space<vmem>>, vector<1x4x1x8xf32>
    %88 = vector.shape_cast %87 : vector<1x4x1x8xf32> to vector<4x8xf32>
    %c0_109 = arith.constant 0 : index
    %c0_110 = arith.constant 0 : index
    %c3_111 = arith.constant 3 : index
    %c0_112 = arith.constant 0 : index
    %89 = vector.load %arg4[%c0_109, %c0_110, %c3_111, %c0_112] : memref<1x4x8x9xf32, #tpu.memory_space<vmem>>, vector<1x4x1x9xf32>
    %90 = vector.shape_cast %89 : vector<1x4x1x9xf32> to vector<4x9xf32>
    %c0_113 = arith.constant 0 : index
    %c0_114 = arith.constant 0 : index
    %c3_115 = arith.constant 3 : index
    %c0_116 = arith.constant 0 : index
    %91 = vector.load %arg5[%c0_113, %c0_114, %c3_115, %c0_116] : memref<1x4x8x8xf32, #tpu.memory_space<vmem>>, vector<1x4x1x8xf32>
    %92 = vector.shape_cast %91 : vector<1x4x1x8xf32> to vector<4x8xf32>
    %93 = vector.extract_strided_slice %82 {offsets = [0, 0], sizes = [4, 8], strides = [1, 1]} : vector<4x9xf32> to vector<4x8xf32>
    %94 = vector.extract_strided_slice %82 {offsets = [0, 1], sizes = [4, 8], strides = [1, 1]} : vector<4x9xf32> to vector<4x8xf32>
    %95 = vector.extract_strided_slice %90 {offsets = [0, 0], sizes = [4, 8], strides = [1, 1]} : vector<4x9xf32> to vector<4x8xf32>
    %96 = vector.extract_strided_slice %90 {offsets = [0, 1], sizes = [4, 8], strides = [1, 1]} : vector<4x9xf32> to vector<4x8xf32>
    %97 = vector.extract_strided_slice %84 {offsets = [0, 0], sizes = [4, 8], strides = [1, 1]} : vector<4x9xf32> to vector<4x8xf32>
    %98 = vector.extract_strided_slice %84 {offsets = [0, 1], sizes = [4, 8], strides = [1, 1]} : vector<4x9xf32> to vector<4x8xf32>
    %99 = tpu.concatenate %93, %86, %94, %95, %92, %96, %97, %88, %98 in 0 : vector<4x8xf32>, vector<4x8xf32>, vector<4x8xf32>, vector<4x8xf32>, vector<4x8xf32>, vector<4x8xf32>, vector<4x8xf32>, vector<4x8xf32>, vector<4x8xf32> -> vector<36x8xf32>
    %cst_117 = arith.constant dense<0.000000e+00> : vector<4x8xf32>
    %100 = tpu.matmul %0, %99, %cst_117 {dimension_numbers = #tpu.dot_dimension_numbers<[1], [0], [0], [1], [0, 0, 1, 1], [], []>} : vector<4x36xf32>, vector<36x8xf32>, vector<4x8xf32> -> vector<4x8xf32>
    %101 = vector.broadcast %1 : vector<4x1xf32> to vector<4x8xf32>
    %102 = arith.addf %100, %101 : vector<4x8xf32>
    %c0_118 = arith.constant 0 : index
    %c0_119 = arith.constant 0 : index
    %c3_120 = arith.constant 3 : index
    %c0_121 = arith.constant 0 : index
    %103 = vector.load %arg10[%c0_118, %c0_119, %c3_120, %c0_121] : memref<1x4x8x8xf32, #tpu.memory_space<vmem>>, vector<1x4x1x8xf32>
    %104 = vector.shape_cast %103 : vector<1x4x1x8xf32> to vector<4x8xf32>
    %105 = vector.shape_cast %102 : vector<4x8xf32> to vector<1x4x1x8xf32>
    tpu.vector_store %arg10[%c0_118, %c0_119, %c3_120, %c0_121], %105 {strides = array<i32>} : memref<1x4x8x8xf32, #tpu.memory_space<vmem>>, vector<1x4x1x8xf32>,
    %c0_122 = arith.constant 0 : index
    %c0_123 = arith.constant 0 : index
    %c4_124 = arith.constant 4 : index
    %c0_125 = arith.constant 0 : index
    %106 = vector.load %arg2[%c0_122, %c0_123, %c4_124, %c0_125] : memref<1x4x8x9xf32, #tpu.memory_space<vmem>>, vector<1x4x1x9xf32>
    %107 = vector.shape_cast %106 : vector<1x4x1x9xf32> to vector<4x9xf32>
    %c0_126 = arith.constant 0 : index
    %c0_127 = arith.constant 0 : index
    %c5 = arith.constant 5 : index
    %c0_128 = arith.constant 0 : index
    %108 = vector.load %arg2[%c0_126, %c0_127, %c5, %c0_128] : memref<1x4x8x9xf32, #tpu.memory_space<vmem>>, vector<1x4x1x9xf32>
    %109 = vector.shape_cast %108 : vector<1x4x1x9xf32> to vector<4x9xf32>
    %c0_129 = arith.constant 0 : index
    %c0_130 = arith.constant 0 : index
    %c4_131 = arith.constant 4 : index
    %c0_132 = arith.constant 0 : index
    %110 = vector.load %arg3[%c0_129, %c0_130, %c4_131, %c0_132] : memref<1x4x8x8xf32, #tpu.memory_space<vmem>>, vector<1x4x1x8xf32>
    %111 = vector.shape_cast %110 : vector<1x4x1x8xf32> to vector<4x8xf32>
    %c0_133 = arith.constant 0 : index
    %c0_134 = arith.constant 0 : index
    %c5_135 = arith.constant 5 : index
    %c0_136 = arith.constant 0 : index
    %112 = vector.load %arg3[%c0_133, %c0_134, %c5_135, %c0_136] : memref<1x4x8x8xf32, #tpu.memory_space<vmem>>, vector<1x4x1x8xf32>
    %113 = vector.shape_cast %112 : vector<1x4x1x8xf32> to vector<4x8xf32>
    %c0_137 = arith.constant 0 : index
    %c0_138 = arith.constant 0 : index
    %c4_139 = arith.constant 4 : index
    %c0_140 = arith.constant 0 : index
    %114 = vector.load %arg4[%c0_137, %c0_138, %c4_139, %c0_140] : memref<1x4x8x9xf32, #tpu.memory_space<vmem>>, vector<1x4x1x9xf32>
    %115 = vector.shape_cast %114 : vector<1x4x1x9xf32> to vector<4x9xf32>
    %c0_141 = arith.constant 0 : index
    %c0_142 = arith.constant 0 : index
    %c4_143 = arith.constant 4 : index
    %c0_144 = arith.constant 0 : index
    %116 = vector.load %arg5[%c0_141, %c0_142, %c4_143, %c0_144] : memref<1x4x8x8xf32, #tpu.memory_space<vmem>>, vector<1x4x1x8xf32>
    %117 = vector.shape_cast %116 : vector<1x4x1x8xf32> to vector<4x8xf32>
    %118 = vector.extract_strided_slice %107 {offsets = [0, 0], sizes = [4, 8], strides = [1, 1]} : vector<4x9xf32> to vector<4x8xf32>
    %119 = vector.extract_strided_slice %107 {offsets = [0, 1], sizes = [4, 8], strides = [1, 1]} : vector<4x9xf32> to vector<4x8xf32>
    %120 = vector.extract_strided_slice %115 {offsets = [0, 0], sizes = [4, 8], strides = [1, 1]} : vector<4x9xf32> to vector<4x8xf32>
    %121 = vector.extract_strided_slice %115 {offsets = [0, 1], sizes = [4, 8], strides = [1, 1]} : vector<4x9xf32> to vector<4x8xf32>
    %122 = vector.extract_strided_slice %109 {offsets = [0, 0], sizes = [4, 8], strides = [1, 1]} : vector<4x9xf32> to vector<4x8xf32>
    %123 = vector.extract_strided_slice %109 {offsets = [0, 1], sizes = [4, 8], strides = [1, 1]} : vector<4x9xf32> to vector<4x8xf32>
    %124 = tpu.concatenate %118, %111, %119, %120, %117, %121, %122, %113, %123 in 0 : vector<4x8xf32>, vector<4x8xf32>, vector<4x8xf32>, vector<4x8xf32>, vector<4x8xf32>, vector<4x8xf32>, vector<4x8xf32>, vector<4x8xf32>, vector<4x8xf32> -> vector<36x8xf32>
    %cst_145 = arith.constant dense<0.000000e+00> : vector<4x8xf32>
    %125 = tpu.matmul %0, %124, %cst_145 {dimension_numbers = #tpu.dot_dimension_numbers<[1], [0], [0], [1], [0, 0, 1, 1], [], []>} : vector<4x36xf32>, vector<36x8xf32>, vector<4x8xf32> -> vector<4x8xf32>
    %126 = vector.broadcast %1 : vector<4x1xf32> to vector<4x8xf32>
    %127 = arith.addf %125, %126 : vector<4x8xf32>
    %c0_146 = arith.constant 0 : index
    %c0_147 = arith.constant 0 : index
    %c4_148 = arith.constant 4 : index
    %c0_149 = arith.constant 0 : index
    %128 = vector.load %arg10[%c0_146, %c0_147, %c4_148, %c0_149] : memref<1x4x8x8xf32, #tpu.memory_space<vmem>>, vector<1x4x1x8xf32>
    %129 = vector.shape_cast %128 : vector<1x4x1x8xf32> to vector<4x8xf32>
    %130 = vector.shape_cast %127 : vector<4x8xf32> to vector<1x4x1x8xf32>
    tpu.vector_store %arg10[%c0_146, %c0_147, %c4_148, %c0_149], %130 {strides = array<i32>} : memref<1x4x8x8xf32, #tpu.memory_space<vmem>>, vector<1x4x1x8xf32>,
    %c0_150 = arith.constant 0 : index
    %c0_151 = arith.constant 0 : index
    %c5_152 = arith.constant 5 : index
    %c0_153 = arith.constant 0 : index
    %131 = vector.load %arg2[%c0_150, %c0_151, %c5_152, %c0_153] : memref<1x4x8x9xf32, #tpu.memory_space<vmem>>, vector<1x4x1x9xf32>
    %132 = vector.shape_cast %131 : vector<1x4x1x9xf32> to vector<4x9xf32>
    %c0_154 = arith.constant 0 : index
    %c0_155 = arith.constant 0 : index
    %c6 = arith.constant 6 : index
    %c0_156 = arith.constant 0 : index
    %133 = vector.load %arg2[%c0_154, %c0_155, %c6, %c0_156] : memref<1x4x8x9xf32, #tpu.memory_space<vmem>>, vector<1x4x1x9xf32>
    %134 = vector.shape_cast %133 : vector<1x4x1x9xf32> to vector<4x9xf32>
    %c0_157 = arith.constant 0 : index
    %c0_158 = arith.constant 0 : index
    %c5_159 = arith.constant 5 : index
    %c0_160 = arith.constant 0 : index
    %135 = vector.load %arg3[%c0_157, %c0_158, %c5_159, %c0_160] : memref<1x4x8x8xf32, #tpu.memory_space<vmem>>, vector<1x4x1x8xf32>
    %136 = vector.shape_cast %135 : vector<1x4x1x8xf32> to vector<4x8xf32>
    %c0_161 = arith.constant 0 : index
    %c0_162 = arith.constant 0 : index
    %c6_163 = arith.constant 6 : index
    %c0_164 = arith.constant 0 : index
    %137 = vector.load %arg3[%c0_161, %c0_162, %c6_163, %c0_164] : memref<1x4x8x8xf32, #tpu.memory_space<vmem>>, vector<1x4x1x8xf32>
    %138 = vector.shape_cast %137 : vector<1x4x1x8xf32> to vector<4x8xf32>
    %c0_165 = arith.constant 0 : index
    %c0_166 = arith.constant 0 : index
    %c5_167 = arith.constant 5 : index
    %c0_168 = arith.constant 0 : index
    %139 = vector.load %arg4[%c0_165, %c0_166, %c5_167, %c0_168] : memref<1x4x8x9xf32, #tpu.memory_space<vmem>>, vector<1x4x1x9xf32>
    %140 = vector.shape_cast %139 : vector<1x4x1x9xf32> to vector<4x9xf32>
    %c0_169 = arith.constant 0 : index
    %c0_170 = arith.constant 0 : index
    %c5_171 = arith.constant 5 : index
    %c0_172 = arith.constant 0 : index
    %141 = vector.load %arg5[%c0_169, %c0_170, %c5_171, %c0_172] : memref<1x4x8x8xf32, #tpu.memory_space<vmem>>, vector<1x4x1x8xf32>
    %142 = vector.shape_cast %141 : vector<1x4x1x8xf32> to vector<4x8xf32>
    %143 = vector.extract_strided_slice %132 {offsets = [0, 0], sizes = [4, 8], strides = [1, 1]} : vector<4x9xf32> to vector<4x8xf32>
    %144 = vector.extract_strided_slice %132 {offsets = [0, 1], sizes = [4, 8], strides = [1, 1]} : vector<4x9xf32> to vector<4x8xf32>
    %145 = vector.extract_strided_slice %140 {offsets = [0, 0], sizes = [4, 8], strides = [1, 1]} : vector<4x9xf32> to vector<4x8xf32>
    %146 = vector.extract_strided_slice %140 {offsets = [0, 1], sizes = [4, 8], strides = [1, 1]} : vector<4x9xf32> to vector<4x8xf32>
    %147 = vector.extract_strided_slice %134 {offsets = [0, 0], sizes = [4, 8], strides = [1, 1]} : vector<4x9xf32> to vector<4x8xf32>
    %148 = vector.extract_strided_slice %134 {offsets = [0, 1], sizes = [4, 8], strides = [1, 1]} : vector<4x9xf32> to vector<4x8xf32>
    %149 = tpu.concatenate %143, %136, %144, %145, %142, %146, %147, %138, %148 in 0 : vector<4x8xf32>, vector<4x8xf32>, vector<4x8xf32>, vector<4x8xf32>, vector<4x8xf32>, vector<4x8xf32>, vector<4x8xf32>, vector<4x8xf32>, vector<4x8xf32> -> vector<36x8xf32>
    %cst_173 = arith.constant dense<0.000000e+00> : vector<4x8xf32>
    %150 = tpu.matmul %0, %149, %cst_173 {dimension_numbers = #tpu.dot_dimension_numbers<[1], [0], [0], [1], [0, 0, 1, 1], [], []>} : vector<4x36xf32>, vector<36x8xf32>, vector<4x8xf32> -> vector<4x8xf32>
    %151 = vector.broadcast %1 : vector<4x1xf32> to vector<4x8xf32>
    %152 = arith.addf %150, %151 : vector<4x8xf32>
    %c0_174 = arith.constant 0 : index
    %c0_175 = arith.constant 0 : index
    %c5_176 = arith.constant 5 : index
    %c0_177 = arith.constant 0 : index
    %153 = vector.load %arg10[%c0_174, %c0_175, %c5_176, %c0_177] : memref<1x4x8x8xf32, #tpu.memory_space<vmem>>, vector<1x4x1x8xf32>
    %154 = vector.shape_cast %153 : vector<1x4x1x8xf32> to vector<4x8xf32>
    %155 = vector.shape_cast %152 : vector<4x8xf32> to vector<1x4x1x8xf32>
    tpu.vector_store %arg10[%c0_174, %c0_175, %c5_176, %c0_177], %155 {strides = array<i32>} : memref<1x4x8x8xf32, #tpu.memory_space<vmem>>, vector<1x4x1x8xf32>,
    %c0_178 = arith.constant 0 : index
    %c0_179 = arith.constant 0 : index
    %c6_180 = arith.constant 6 : index
    %c0_181 = arith.constant 0 : index
    %156 = vector.load %arg2[%c0_178, %c0_179, %c6_180, %c0_181] : memref<1x4x8x9xf32, #tpu.memory_space<vmem>>, vector<1x4x1x9xf32>
    %157 = vector.shape_cast %156 : vector<1x4x1x9xf32> to vector<4x9xf32>
    %c0_182 = arith.constant 0 : index
    %c0_183 = arith.constant 0 : index
    %c7 = arith.constant 7 : index
    %c0_184 = arith.constant 0 : index
    %158 = vector.load %arg2[%c0_182, %c0_183, %c7, %c0_184] : memref<1x4x8x9xf32, #tpu.memory_space<vmem>>, vector<1x4x1x9xf32>
    %159 = vector.shape_cast %158 : vector<1x4x1x9xf32> to vector<4x9xf32>
    %c0_185 = arith.constant 0 : index
    %c0_186 = arith.constant 0 : index
    %c6_187 = arith.constant 6 : index
    %c0_188 = arith.constant 0 : index
    %160 = vector.load %arg3[%c0_185, %c0_186, %c6_187, %c0_188] : memref<1x4x8x8xf32, #tpu.memory_space<vmem>>, vector<1x4x1x8xf32>
    %161 = vector.shape_cast %160 : vector<1x4x1x8xf32> to vector<4x8xf32>
    %c0_189 = arith.constant 0 : index
    %c0_190 = arith.constant 0 : index
    %c7_191 = arith.constant 7 : index
    %c0_192 = arith.constant 0 : index
    %162 = vector.load %arg3[%c0_189, %c0_190, %c7_191, %c0_192] : memref<1x4x8x8xf32, #tpu.memory_space<vmem>>, vector<1x4x1x8xf32>
    %163 = vector.shape_cast %162 : vector<1x4x1x8xf32> to vector<4x8xf32>
    %c0_193 = arith.constant 0 : index
    %c0_194 = arith.constant 0 : index
    %c6_195 = arith.constant 6 : index
    %c0_196 = arith.constant 0 : index
    %164 = vector.load %arg4[%c0_193, %c0_194, %c6_195, %c0_196] : memref<1x4x8x9xf32, #tpu.memory_space<vmem>>, vector<1x4x1x9xf32>
    %165 = vector.shape_cast %164 : vector<1x4x1x9xf32> to vector<4x9xf32>
    %c0_197 = arith.constant 0 : index
    %c0_198 = arith.constant 0 : index
    %c6_199 = arith.constant 6 : index
    %c0_200 = arith.constant 0 : index
    %166 = vector.load %arg5[%c0_197, %c0_198, %c6_199, %c0_200] : memref<1x4x8x8xf32, #tpu.memory_space<vmem>>, vector<1x4x1x8xf32>
    %167 = vector.shape_cast %166 : vector<1x4x1x8xf32> to vector<4x8xf32>
    %168 = vector.extract_strided_slice %157 {offsets = [0, 0], sizes = [4, 8], strides = [1, 1]} : vector<4x9xf32> to vector<4x8xf32>
    %169 = vector.extract_strided_slice %157 {offsets = [0, 1], sizes = [4, 8], strides = [1, 1]} : vector<4x9xf32> to vector<4x8xf32>
    %170 = vector.extract_strided_slice %165 {offsets = [0, 0], sizes = [4, 8], strides = [1, 1]} : vector<4x9xf32> to vector<4x8xf32>
    %171 = vector.extract_strided_slice %165 {offsets = [0, 1], sizes = [4, 8], strides = [1, 1]} : vector<4x9xf32> to vector<4x8xf32>
    %172 = vector.extract_strided_slice %159 {offsets = [0, 0], sizes = [4, 8], strides = [1, 1]} : vector<4x9xf32> to vector<4x8xf32>
    %173 = vector.extract_strided_slice %159 {offsets = [0, 1], sizes = [4, 8], strides = [1, 1]} : vector<4x9xf32> to vector<4x8xf32>
    %174 = tpu.concatenate %168, %161, %169, %170, %167, %171, %172, %163, %173 in 0 : vector<4x8xf32>, vector<4x8xf32>, vector<4x8xf32>, vector<4x8xf32>, vector<4x8xf32>, vector<4x8xf32>, vector<4x8xf32>, vector<4x8xf32>, vector<4x8xf32> -> vector<36x8xf32>
    %cst_201 = arith.constant dense<0.000000e+00> : vector<4x8xf32>
    %175 = tpu.matmul %0, %174, %cst_201 {dimension_numbers = #tpu.dot_dimension_numbers<[1], [0], [0], [1], [0, 0, 1, 1], [], []>} : vector<4x36xf32>, vector<36x8xf32>, vector<4x8xf32> -> vector<4x8xf32>
    %176 = vector.broadcast %1 : vector<4x1xf32> to vector<4x8xf32>
    %177 = arith.addf %175, %176 : vector<4x8xf32>
    %c0_202 = arith.constant 0 : index
    %c0_203 = arith.constant 0 : index
    %c6_204 = arith.constant 6 : index
    %c0_205 = arith.constant 0 : index
    %178 = vector.load %arg10[%c0_202, %c0_203, %c6_204, %c0_205] : memref<1x4x8x8xf32, #tpu.memory_space<vmem>>, vector<1x4x1x8xf32>
    %179 = vector.shape_cast %178 : vector<1x4x1x8xf32> to vector<4x8xf32>
    %180 = vector.shape_cast %177 : vector<4x8xf32> to vector<1x4x1x8xf32>
    tpu.vector_store %arg10[%c0_202, %c0_203, %c6_204, %c0_205], %180 {strides = array<i32>} : memref<1x4x8x8xf32, #tpu.memory_space<vmem>>, vector<1x4x1x8xf32>,
    %c0_206 = arith.constant 0 : index
    %c0_207 = arith.constant 0 : index
    %c7_208 = arith.constant 7 : index
    %c0_209 = arith.constant 0 : index
    %181 = vector.load %arg2[%c0_206, %c0_207, %c7_208, %c0_209] : memref<1x4x8x9xf32, #tpu.memory_space<vmem>>, vector<1x4x1x9xf32>
    %182 = vector.shape_cast %181 : vector<1x4x1x9xf32> to vector<4x9xf32>
    %c0_210 = arith.constant 0 : index
    %c0_211 = arith.constant 0 : index
    %c7_212 = arith.constant 7 : index
    %c0_213 = arith.constant 0 : index
    %183 = vector.load %arg3[%c0_210, %c0_211, %c7_212, %c0_213] : memref<1x4x8x8xf32, #tpu.memory_space<vmem>>, vector<1x4x1x8xf32>
    %184 = vector.shape_cast %183 : vector<1x4x1x8xf32> to vector<4x8xf32>
    %c0_214 = arith.constant 0 : index
    %c0_215 = arith.constant 0 : index
    %c7_216 = arith.constant 7 : index
    %c0_217 = arith.constant 0 : index
    %185 = vector.load %arg4[%c0_214, %c0_215, %c7_216, %c0_217] : memref<1x4x8x9xf32, #tpu.memory_space<vmem>>, vector<1x4x1x9xf32>
    %186 = vector.shape_cast %185 : vector<1x4x1x9xf32> to vector<4x9xf32>
    %c0_218 = arith.constant 0 : index
    %c0_219 = arith.constant 0 : index
    %c7_220 = arith.constant 7 : index
    %c0_221 = arith.constant 0 : index
    %187 = vector.load %arg5[%c0_218, %c0_219, %c7_220, %c0_221] : memref<1x4x8x8xf32, #tpu.memory_space<vmem>>, vector<1x4x1x8xf32>
    %188 = vector.shape_cast %187 : vector<1x4x1x8xf32> to vector<4x8xf32>
    %189 = vector.extract_strided_slice %182 {offsets = [0, 0], sizes = [4, 8], strides = [1, 1]} : vector<4x9xf32> to vector<4x8xf32>
    %190 = vector.extract_strided_slice %182 {offsets = [0, 1], sizes = [4, 8], strides = [1, 1]} : vector<4x9xf32> to vector<4x8xf32>
    %191 = vector.extract_strided_slice %186 {offsets = [0, 0], sizes = [4, 8], strides = [1, 1]} : vector<4x9xf32> to vector<4x8xf32>
    %192 = vector.extract_strided_slice %186 {offsets = [0, 1], sizes = [4, 8], strides = [1, 1]} : vector<4x9xf32> to vector<4x8xf32>
    %193 = vector.extract_strided_slice %3 {offsets = [0, 0], sizes = [4, 8], strides = [1, 1]} : vector<4x9xf32> to vector<4x8xf32>
    %194 = vector.extract_strided_slice %3 {offsets = [0, 1], sizes = [4, 8], strides = [1, 1]} : vector<4x9xf32> to vector<4x8xf32>
    %195 = tpu.concatenate %189, %184, %190, %191, %188, %192, %193, %5, %194 in 0 : vector<4x8xf32>, vector<4x8xf32>, vector<4x8xf32>, vector<4x8xf32>, vector<4x8xf32>, vector<4x8xf32>, vector<4x8xf32>, vector<4x8xf32>, vector<4x8xf32> -> vector<36x8xf32>
    %cst_222 = arith.constant dense<0.000000e+00> : vector<4x8xf32>
    %196 = tpu.matmul %0, %195, %cst_222 {dimension_numbers = #tpu.dot_dimension_numbers<[1], [0], [0], [1], [0, 0, 1, 1], [], []>} : vector<4x36xf32>, vector<36x8xf32>, vector<4x8xf32> -> vector<4x8xf32>
    %197 = vector.broadcast %1 : vector<4x1xf32> to vector<4x8xf32>
    %198 = arith.addf %196, %197 : vector<4x8xf32>
    %c0_223 = arith.constant 0 : index
    %c0_224 = arith.constant 0 : index
    %c7_225 = arith.constant 7 : index
    %c0_226 = arith.constant 0 : index
    %199 = vector.load %arg10[%c0_223, %c0_224, %c7_225, %c0_226] : memref<1x4x8x8xf32, #tpu.memory_space<vmem>>, vector<1x4x1x8xf32>
    %200 = vector.shape_cast %199 : vector<1x4x1x8xf32> to vector<4x8xf32>
    %201 = vector.shape_cast %198 : vector<4x8xf32> to vector<1x4x1x8xf32>
    tpu.vector_store %arg10[%c0_223, %c0_224, %c7_225, %c0_226], %201 {strides = array<i32>} : memref<1x4x8x8xf32, #tpu.memory_space<vmem>>, vector<1x4x1x8xf32>,
    return
  }
  func.func @transform_0(%arg0: i32, %arg1: i32) -> (i32, i32, i32, i32) {
    %c0_i32 = arith.constant 0 : i32
    %c0_i32_0 = arith.constant 0 : i32
    %c0_i32_1 = arith.constant 0 : i32
    return %arg0, %c0_i32, %arg1, %c0_i32_0 : i32, i32, i32, i32
  }
  func.func @transform_1(%arg0: i32, %arg1: i32) -> (i32, i32, i32, i32) {
    %c0_i32 = arith.constant 0 : i32
    %c0_i32_0 = arith.constant 0 : i32
    %c0_i32_1 = arith.constant 0 : i32
    return %arg0, %c0_i32, %arg1, %c0_i32_0 : i32, i32, i32, i32
  }
  func.func @transform_2(%arg0: i32, %arg1: i32) -> (i32, i32, i32, i32) {
    %c0_i32 = arith.constant 0 : i32
    %c0_i32_0 = arith.constant 0 : i32
    %c0_i32_1 = arith.constant 0 : i32
    return %arg0, %c0_i32, %arg1, %c0_i32_0 : i32, i32, i32, i32
  }
  func.func @transform_3(%arg0: i32, %arg1: i32) -> (i32, i32, i32, i32) {
    %c0_i32 = arith.constant 0 : i32
    %c0_i32_0 = arith.constant 0 : i32
    %c0_i32_1 = arith.constant 0 : i32
    return %arg0, %c0_i32, %arg1, %c0_i32_0 : i32, i32, i32, i32
  }
  func.func @transform_4(%arg0: i32, %arg1: i32) -> (i32, i32, i32, i32) {
    %c0_i32 = arith.constant 0 : i32
    %c0_i32_0 = arith.constant 0 : i32
    %c0_i32_1 = arith.constant 0 : i32
    return %arg0, %arg1, %c0_i32, %c0_i32_0 : i32, i32, i32, i32
  }
  func.func @transform_5(%arg0: i32, %arg1: i32) -> (i32, i32, i32, i32) {
    %c0_i32 = arith.constant 0 : i32
    %c0_i32_0 = arith.constant 0 : i32
    %c0_i32_1 = arith.constant 0 : i32
    return %arg0, %arg1, %c0_i32, %c0_i32_0 : i32, i32, i32, i32
  }
  func.func @transform_6(%arg0: i32, %arg1: i32) -> (i32, i32) {
    %c0_i32 = arith.constant 0 : i32
    %c0_i32_0 = arith.constant 0 : i32
    %c0_i32_1 = arith.constant 0 : i32
    return %c0_i32, %c0_i32_0 : i32, i32
  }
  func.func @transform_7(%arg0: i32, %arg1: i32) -> (i32, i32) {
    %c0_i32 = arith.constant 0 : i32
    %c0_i32_0 = arith.constant 0 : i32
    %c0_i32_1 = arith.constant 0 : i32
    return %c0_i32, %c0_i32_0 : i32, i32
  }
  func.func @transform_8(%arg0: i32, %arg1: i32) -> (i32, i32, i32, i32) {
    %c0_i32 = arith.constant 0 : i32
    %c0_i32_0 = arith.constant 0 : i32
    %c0_i32_1 = arith.constant 0 : i32
    return %arg0, %c0_i32, %arg1, %c0_i32_0 : i32, i32, i32, i32
  }
}

</mosaic_0001>

<llo_original>
// kernel: downsample.1
$region0: #{downsample.1}
  #allocation0 [shape = 'u32[]', space=smem, size = 0x4, offset = 0x4, fixed_abs, tag = 'smem constant byte address 0x4 - core index']
  #allocation1 [shape = 'u32[144,128]{1,0:T(1,128)}', space=vmem, size = 0x12000, scoped, tag = 'internal scratch']
  %s0 = inlined_call_operand.vmem [shape: f32[2,4,9,9], index: 0, kind: input, shape index: {}]
  %s1 = inlined_call_operand.vmem [shape: f32[2,4,9,8], index: 1, kind: input, shape index: {}]
  %s2 = inlined_call_operand.vmem [shape: f32[2,4,8,9], index: 2, kind: input, shape index: {}]
  %s3 = inlined_call_operand.vmem [shape: f32[2,4,8,8], index: 3, kind: input, shape index: {}]
  %s4 = inlined_call_operand.vmem [shape: f32[2,1,4,9], index: 4, kind: input, shape index: {}]
  %s5 = inlined_call_operand.vmem [shape: f32[2,1,4,8], index: 5, kind: input, shape index: {}]
  %s6 = inlined_call_operand.vmem [shape: f32[4,36], index: 6, kind: input, shape index: {}]
  %s7 = inlined_call_operand.vmem [shape: f32[4,1], index: 7, kind: input, shape index: {}]
  %s8 = inlined_call_operand.hbm [shape: f32[2,4,8,8], index: 8, kind: output, shape index: {}]
  %s9 = sld [smem:[#allocation0]]
  $region141: #{downsample.1} parent=0
    _
  %s11 = ssub.s32 1, %s9
  %s12 = scalar_select 0, %s11, %s9
  $region1: #{downsample.1} parent=0
    #allocation2 [shape = 'u8[32768]{0}', space=vmem, size = 0x8000, scoped, tag = 'input window, operand 0']
    #allocation3 [shape = 'u8[32768]{0}', space=vmem, size = 0x8000, scoped, tag = 'input window, operand 1']
    #allocation4 [shape = 'u8[32768]{0}', space=vmem, size = 0x8000, scoped, tag = 'output window, operand 0']
    #allocation5 [shape = 's32[2]{0}', space=sflag, size = 0x8, scoped, tag = 'scoped memory for downsample.1']
    %13 = vsyncpa [#allocation5], 0
    %s14 = scalar_lea.sflag [#allocation5], 1
    %15 = vsyncpa %s14, 0
    loop: start=0, step=1, limit=4
    $region2: #{downsample.1} parent=1 // loop_pre_header
      _
    $region3: #{downsample.1} parent=1 // loop_header
      %s17 = sphi 0, %s21
      %p18 = scmp.ge.s32.totalorder %s17, 4
      %s24 = sphi 0, %s36
      %s25 = sphi 0, %s32
      %s26 = sphi 0, %s24
      %s27 = sphi 0, %s25
      %s28 = sphi 0, %s26
      %s29 = sphi 0, %s27
      %s41 = sphi 0, %s43
      %s44 = sphi 0, %s41
      %s45 = sphi 0, %s44
      %s61 = sphi 0, %s45
      %s69 = sphi 0, %s71
      %s72 = sphi 0, %s69
      %s73 = sphi 0, %s72
      %s89 = sphi 0, %s73
      %s97 = sphi 0, %s99
      %s100 = sphi 0, %s97
      %s101 = sphi 0, %s100
      %s117 = sphi 0, %s101
      %s125 = sphi 0, %s127
      %s128 = sphi 0, %s125
      %s129 = sphi 0, %s128
      %s145 = sphi 0, %s129
      %s153 = sphi 0, %s155
      %s156 = sphi 0, %s153
      %s157 = sphi 0, %s156
      %s173 = sphi 0, %s157
      %s181 = sphi 0, %s183
      %s184 = sphi 0, %s181
      %s185 = sphi 0, %s184
      %s201 = sphi 0, %s185
      %s205 = sphi 0, %s205
      %s207 = sphi 0, %s205
      %s208 = sphi 0, %s207
      %s222 = sphi 0, %s208
      %s226 = sphi 0, %s226
      %s228 = sphi 0, %s226
      %s229 = sphi 0, %s228
      %s243 = sphi 0, %s229
      %s251 = sphi 0, %s253
      %s254 = sphi 0, %s251
      %s255 = sphi 0, %s254
      %s271 = sphi 0, %s255
    $region4: #{downsample.1} parent=1 // loop_header_branch
      %20 = sbr.rel (%p18) target = $region8
    $region5: #{downsample.1} parent=1 // loop_body
      %s22 = ssub.s32 %s17, 1
      %s23 = ssub.s32 %s17, 2
      %s30 = sadd.s32 1, %s25
      %p31 = scmp.ge.s32.totalorder %s30, 1
      %s32 = scalar_select %p31, 0, %s30
      %s33 = sadd.s32 1, %s24
      %s34 = scalar_select %p31, %s33, %s24
      %p35 = scmp.ge.s32.totalorder %s34, 2
      %s36 = scalar_select %p35, 0, %s34
      %s37 = ssub.s32 %s24, %s36
      %s38 = ssub.s32 %s25, %s32
      %s39 = sor.u32 %s37, %s38
      %p40 = scmp.eq.s32.totalorder %s39, 0
      %s42 = sadd.s32 %s41, 1
      %s43 = scalar_select %p40, %s41, %s42
      %p46 = pneg %p40
      %p47 = scmp.eq.s32.totalorder %s17, 1
      %p48 = por %p46, %p47
      %p49 = scmp.ne.s32.totalorder %s41, %s44
      %p50 = scmp.eq.s32.totalorder %s17, 0
      %p51 = por %p49, %p50
      %p52 = scmp.ne.s32.totalorder %s41, %s44
      %p53 = scmp.eq.s32.totalorder %s22, 1
      %p54 = por %p52, %p53
      %p55 = scmp.ne.s32.totalorder %s44, %s45
      %p56 = scmp.eq.s32.totalorder %s22, 0
      %p57 = por %p55, %p56
      %p58 = scmp.ne.s32.totalorder %s44, %s45
      %p59 = scmp.eq.s32.totalorder %s23, 1
      %p60 = por %p58, %p59
      %p62 = scmp.ne.s32.totalorder %s45, %s61
      %p63 = scmp.eq.s32.totalorder %s23, 0
      %p64 = por %p62, %p63
      %s65 = ssub.s32 %s24, %s36
      %s66 = ssub.s32 %s25, %s32
      %s67 = sor.u32 %s65, %s66
      %p68 = scmp.eq.s32.totalorder %s67, 0
      %s70 = sadd.s32 %s69, 1
      %s71 = scalar_select %p68, %s69, %s70
      %p74 = pneg %p68
      %p75 = scmp.eq.s32.totalorder %s17, 1
      %p76 = por %p74, %p75
      %p77 = scmp.ne.s32.totalorder %s69, %s72
      %p78 = scmp.eq.s32.totalorder %s17, 0
      %p79 = por %p77, %p78
      %p80 = scmp.ne.s32.totalorder %s69, %s72
      %p81 = scmp.eq.s32.totalorder %s22, 1
      %p82 = por %p80, %p81
      %p83 = scmp.ne.s32.totalorder %s72, %s73
      %p84 = scmp.eq.s32.totalorder %s22, 0
      %p85 = por %p83, %p84
      %p86 = scmp.ne.s32.totalorder %s72, %s73
      %p87 = scmp.eq.s32.totalorder %s23, 1
      %p88 = por %p86, %p87
      %p90 = scmp.ne.s32.totalorder %s73, %s89
      %p91 = scmp.eq.s32.totalorder %s23, 0
      %p92 = por %p90, %p91
      %s93 = ssub.s32 %s24, %s36
      %s94 = ssub.s32 %s25, %s32
      %s95 = sor.u32 %s93, %s94
      %p96 = scmp.eq.s32.totalorder %s95, 0
      %s98 = sadd.s32 %s97, 1
      %s99 = scalar_select %p96, %s97, %s98
      %p102 = pneg %p96
      %p103 = scmp.eq.s32.totalorder %s17, 1
      %p104 = por %p102, %p103
      %p105 = scmp.ne.s32.totalorder %s97, %s100
      %p106 = scmp.eq.s32.totalorder %s17, 0
      %p107 = por %p105, %p106
      %p108 = scmp.ne.s32.totalorder %s97, %s100
      %p109 = scmp.eq.s32.totalorder %s22, 1
      %p110 = por %p108, %p109
      %p111 = scmp.ne.s32.totalorder %s100, %s101
      %p112 = scmp.eq.s32.totalorder %s22, 0
      %p113 = por %p111, %p112
      %p114 = scmp.ne.s32.totalorder %s100, %s101
      %p115 = scmp.eq.s32.totalorder %s23, 1
      %p116 = por %p114, %p115
      %p118 = scmp.ne.s32.totalorder %s101, %s117
      %p119 = scmp.eq.s32.totalorder %s23, 0
      %p120 = por %p118, %p119
      %s121 = ssub.s32 %s24, %s36
      %s122 = ssub.s32 %s25, %s32
      %s123 = sor.u32 %s121, %s122
      %p124 = scmp.eq.s32.totalorder %s123, 0
      %s126 = sadd.s32 %s125, 1
      %s127 = scalar_select %p124, %s125, %s126
      %p130 = pneg %p124
      %p131 = scmp.eq.s32.totalorder %s17, 1
      %p132 = por %p130, %p131
      %p133 = scmp.ne.s32.totalorder %s125, %s128
      %p134 = scmp.eq.s32.totalorder %s17, 0
      %p135 = por %p133, %p134
      %p136 = scmp.ne.s32.totalorder %s125, %s128
      %p137 = scmp.eq.s32.totalorder %s22, 1
      %p138 = por %p136, %p137
      %p139 = scmp.ne.s32.totalorder %s128, %s129
      %p140 = scmp.eq.s32.totalorder %s22, 0
      %p141 = por %p139, %p140
      %p142 = scmp.ne.s32.totalorder %s128, %s129
      %p143 = scmp.eq.s32.totalorder %s23, 1
      %p144 = por %p142, %p143
      %p146 = scmp.ne.s32.totalorder %s129, %s145
      %p147 = scmp.eq.s32.totalorder %s23, 0
      %p148 = por %p146, %p147
      %s149 = ssub.s32 %s24, %s36
      %s150 = ssub.s32 %s25, %s32
      %s151 = sor.u32 %s149, %s150
      %p152 = scmp.eq.s32.totalorder %s151, 0
      %s154 = sadd.s32 %s153, 1
      %s155 = scalar_select %p152, %s153, %s154
      %p158 = pneg %p152
      %p159 = scmp.eq.s32.totalorder %s17, 1
      %p160 = por %p158, %p159
      %p161 = scmp.ne.s32.totalorder %s153, %s156
      %p162 = scmp.eq.s32.totalorder %s17, 0
      %p163 = por %p161, %p162
      %p164 = scmp.ne.s32.totalorder %s153, %s156
      %p165 = scmp.eq.s32.totalorder %s22, 1
      %p166 = por %p164, %p165
      %p167 = scmp.ne.s32.totalorder %s156, %s157
      %p168 = scmp.eq.s32.totalorder %s22, 0
      %p169 = por %p167, %p168
      %p170 = scmp.ne.s32.totalorder %s156, %s157
      %p171 = scmp.eq.s32.totalorder %s23, 1
      %p172 = por %p170, %p171
      %p174 = scmp.ne.s32.totalorder %s157, %s173
      %p175 = scmp.eq.s32.totalorder %s23, 0
      %p176 = por %p174, %p175
      %s177 = ssub.s32 %s24, %s36
      %s178 = ssub.s32 %s25, %s32
      %s179 = sor.u32 %s177, %s178
      %p180 = scmp.eq.s32.totalorder %s179, 0
      %s182 = sadd.s32 %s181, 1
      %s183 = scalar_select %p180, %s181, %s182
      %p186 = pneg %p180
      %p187 = scmp.eq.s32.totalorder %s17, 1
      %p188 = por %p186, %p187
      %p189 = scmp.ne.s32.totalorder %s181, %s184
      %p190 = scmp.eq.s32.totalorder %s17, 0
      %p191 = por %p189, %p190
      %p192 = scmp.ne.s32.totalorder %s181, %s184
      %p193 = scmp.eq.s32.totalorder %s22, 1
      %p194 = por %p192, %p193
      %p195 = scmp.ne.s32.totalorder %s184, %s185
      %p196 = scmp.eq.s32.totalorder %s22, 0
      %p197 = por %p195, %p196
      %p198 = scmp.ne.s32.totalorder %s184, %s185
      %p199 = scmp.eq.s32.totalorder %s23, 1
      %p200 = por %p198, %p199
      %p202 = scmp.ne.s32.totalorder %s185, %s201
      %p203 = scmp.eq.s32.totalorder %s23, 0
      %p204 = por %p202, %p203
      %s206 = sadd.s32 %s205, 1
      %p209 = scmp.eq.s32.totalorder %s17, 1
      %p210 = scmp.ne.s32.totalorder %s205, %s207
      %p211 = scmp.eq.s32.totalorder %s17, 0
      %p212 = por %p210, %p211
      %p213 = scmp.ne.s32.totalorder %s205, %s207
      %p214 = scmp.eq.s32.totalorder %s22, 1
      %p215 = por %p213, %p214
      %p216 = scmp.ne.s32.totalorder %s207, %s208
      %p217 = scmp.eq.s32.totalorder %s22, 0
      %p218 = por %p216, %p217
      %p219 = scmp.ne.s32.totalorder %s207, %s208
      %p220 = scmp.eq.s32.totalorder %s23, 1
      %p221 = por %p219, %p220
      %p223 = scmp.ne.s32.totalorder %s208, %s222
      %p224 = scmp.eq.s32.totalorder %s23, 0
      %p225 = por %p223, %p224
      %s227 = sadd.s32 %s226, 1
      %p230 = scmp.eq.s32.totalorder %s17, 1
      %p231 = scmp.ne.s32.totalorder %s226, %s228
      %p232 = scmp.eq.s32.totalorder %s17, 0
      %p233 = por %p231, %p232
      %p234 = scmp.ne.s32.totalorder %s226, %s228
      %p235 = scmp.eq.s32.totalorder %s22, 1
      %p236 = por %p234, %p235
      %p237 = scmp.ne.s32.totalorder %s228, %s229
      %p238 = scmp.eq.s32.totalorder %s22, 0
      %p239 = por %p237, %p238
      %p240 = scmp.ne.s32.totalorder %s228, %s229
      %p241 = scmp.eq.s32.totalorder %s23, 1
      %p242 = por %p240, %p241
      %p244 = scmp.ne.s32.totalorder %s229, %s243
      %p245 = scmp.eq.s32.totalorder %s23, 0
      %p246 = por %p244, %p245
      %s247 = ssub.s32 %s24, %s36
      %s248 = ssub.s32 %s25, %s32
      %s249 = sor.u32 %s247, %s248
      %p250 = scmp.eq.s32.totalorder %s249, 0
      %s252 = sadd.s32 %s251, 1
      %s253 = scalar_select %p250, %s251, %s252
      %p256 = pneg %p250
      %p257 = scmp.eq.s32.totalorder %s17, 1
      %p258 = por %p256, %p257
      %p259 = scmp.ne.s32.totalorder %s251, %s254
      %p260 = scmp.eq.s32.totalorder %s17, 0
      %p261 = por %p259, %p260
      %p262 = scmp.ne.s32.totalorder %s251, %s254
      %p263 = scmp.eq.s32.totalorder %s22, 1
      %p264 = por %p262, %p263
      %p265 = scmp.ne.s32.totalorder %s254, %s255
      %p266 = scmp.eq.s32.totalorder %s22, 0
      %p267 = por %p265, %p266
      %p268 = scmp.ne.s32.totalorder %s254, %s255
      %p269 = scmp.eq.s32.totalorder %s23, 1
      %p270 = por %p268, %p269
      %p272 = scmp.ne.s32.totalorder %s255, %s271
      %p273 = scmp.eq.s32.totalorder %s23, 0
      %p274 = por %p272, %p273
      %p275 = scmp.le.s32.totalorder 1, %s17
      %p276 = scmp.lt.s32.totalorder %s17, 3
      %p277 = pnand %p275, %p276
      %p278 = pneg %p277
      // Predicated region
      $region9: #{downsample.1} parent=5 // pred_check
        _
      $region10: #{downsample.1} parent=5 // pred_check_branch
        %280 = sbr.rel (%p277) target = $region12
      $region11: #{downsample.1} parent=5 // pred_region
        %s281 = ssub.s32 %s17, 1
        // Predicated region
        $region13: #{downsample.1} parent=11 // pred_check
          %p282 = pneg %p218
        $region14: #{downsample.1} parent=11 // pred_check_branch
          %284 = sbr.rel (%p282) target = $region16
        $region15: #{downsample.1} parent=11 // pred_region
          _
        $region16: #{downsample.1} parent=11 // pred_fallthru
          _
        // Predicated region
        $region17: #{downsample.1} parent=11 // pred_check
          %p285 = pneg %p239
        $region18: #{downsample.1} parent=11 // pred_check_branch
          %287 = sbr.rel (%p285) target = $region20
        $region19: #{downsample.1} parent=11 // pred_region
          _
        $region20: #{downsample.1} parent=11 // pred_fallthru
          _
      $region12: #{downsample.1} parent=5 // pred_fallthru
        _
      %p288 = scmp.lt.s32.totalorder %s17, 2
      // Predicated region
      $region21: #{downsample.1} parent=5 // pred_check
        %p289 = pneg %p288
      $region22: #{downsample.1} parent=5 // pred_check_branch
        %291 = sbr.rel (%p289) target = $region24
      $region23: #{downsample.1} parent=5 // pred_region
        // Predicated region
        $region25: #{downsample.1} parent=23 // pred_check
          %p292 = pneg %p51
        $region26: #{downsample.1} parent=23 // pred_check_branch
          %294 = sbr.rel (%p292) target = $region28
        $region27: #{downsample.1} parent=23 // pred_region
          %s295 = sand.u32 %s41, 1
          %s296 = sand.u32 %s41, 1
          %s297 = smul.addr %s296, 32
          %s298 = scalar_lea.vmem [#allocation2], %s297
          %s299 = smul.addr %s24, 8
          %s300 = sadd.s32 %s25, %s299
          %s301 = smul.addr %s300, 8
          %s302 = scalar_lea.vmem %s0, %s301
          // Predicated region
          $region29: #{downsample.1} parent=27 // pred_check
            _
          $region30: #{downsample.1} parent=27 // pred_check_branch
            %304 = sbr.rel (0) target = $region32
          $region31: #{downsample.1} parent=27 // pred_region
            // Predicated region
            $region33: #{downsample.1} parent=31 // pred_check
              _
            $region34: #{downsample.1} parent=31 // pred_check_branch
              %306 = sbr.rel (0) target = $region36
            $region35: #{downsample.1} parent=31 // pred_region
              // Predicated region
              $region48: #{downsample.1} parent=35 // pred_check
                _
              $region49: #{downsample.1} parent=35 // pred_check_branch
                %328 = sbr.rel (0) target = $region51
              $region50: #{downsample.1} parent=35 // pred_region
                loop: start=0, step=1, limit=1
                $region52: #{downsample.1} parent=50 // loop_pre_header
                  _
                $region53: #{downsample.1} parent=50 // loop_header
                  %s330 = sphi 0, %s334
                  %p331 = scmp.ge.s32.totalorder %s330, 1
                  %s335 = sphi %s302, %s302
                  %s336 = sphi %s298, %s298
                $region54: #{downsample.1} parent=50 // loop_header_branch
                  %333 = sbr.rel (%p331) target = $region58
                $region55: #{downsample.1} parent=50 // loop_body
                  %v337 = vld [vmem:[%s335] sm:$0xff]
                  %338 = vst [vmem:[%s336] sm:$0xff] %v337
                  %v339 = vld [vmem:[%s335 + $0x10] sm:$0xff]
                  %340 = vst [vmem:[%s336 + $0x8] sm:$0xff] %v339
                  %v341 = vld [vmem:[%s335 + $0x20] sm:$0xff]
                  %342 = vst [vmem:[%s336 + $0x10] sm:$0xff] %v341
                  %v343 = vld [vmem:[%s335 + $0x30] sm:$0xff]
                  %344 = vst [vmem:[%s336 + $0x18] sm:$0xff] %v343
                $region56: #{downsample.1} parent=50 // loop_footer
                  %s334 = sadd.s32 1, %s330
                $region57: #{downsample.1} parent=50 // loop_footer_branch
                  %329 = sbr.rel target = $region53
                $region58: #{downsample.1} parent=50 // loop_exit
                  _
              $region51: #{downsample.1} parent=35 // pred_fallthru
                _
              // Predicated region
              $region59: #{downsample.1} parent=35 // pred_check
                _
              $region60: #{downsample.1} parent=35 // pred_check_branch
                %346 = sbr.rel target = $region62
              $region61: #{downsample.1} parent=35 // pred_region
                _
              $region62: #{downsample.1} parent=35 // pred_fallthru
                _
            $region36: #{downsample.1} parent=31 // pred_fallthru
              _
            // Predicated region
            $region37: #{downsample.1} parent=31 // pred_check
              _
            $region38: #{downsample.1} parent=31 // pred_check_branch
              %308 = sbr.rel target = $region40
            $region39: #{downsample.1} parent=31 // pred_region
              %s310 = ssub.s32 256, 1
              loop: start=0, step=1, limit=1
              $region41: #{downsample.1} parent=39 // loop_pre_header
                _
              $region42: #{downsample.1} parent=39 // loop_header
                %s312 = sphi 0, %s316
                %p313 = scmp.ge.s32.totalorder %s312, 1
                %s317 = sphi %s302, %s302
                %s318 = sphi %s298, %s298
              $region43: #{downsample.1} parent=39 // loop_header_branch
                %315 = sbr.rel (%p313) target = $region47
              $region44: #{downsample.1} parent=39 // loop_body
                %v319 = vld [vmem:[%s317] sm:%s310]
                %320 = vst [vmem:[%s318] sm:%s310] %v319
                %v321 = vld [vmem:[%s317 + $0x10] sm:%s310]
                %322 = vst [vmem:[%s318 + $0x8] sm:%s310] %v321
                %v323 = vld [vmem:[%s317 + $0x20] sm:%s310]
                %324 = vst [vmem:[%s318 + $0x10] sm:%s310] %v323
                %v325 = vld [vmem:[%s317 + $0x30] sm:%s310]
                %326 = vst [vmem:[%s318 + $0x18] sm:%s310] %v325
              $region45: #{downsample.1} parent=39 // loop_footer
                %s316 = sadd.s32 1, %s312
              $region46: #{downsample.1} parent=39 // loop_footer_branch
                %311 = sbr.rel target = $region42
              $region47: #{downsample.1} parent=39 // loop_exit
                _
            $region40: #{downsample.1} parent=31 // pred_fallthru
              _
          $region32: #{downsample.1} parent=27 // pred_fallthru
            _
          %347 = vnop
        $region28: #{downsample.1} parent=23 // pred_fallthru
          _
        // Predicated region
        $region63: #{downsample.1} parent=23 // pred_check
          %p348 = pneg %p79
        $region64: #{downsample.1} parent=23 // pred_check_branch
          %350 = sbr.rel (%p348) target = $region66
        $region65: #{downsample.1} parent=23 // pred_region
          %s351 = sand.u32 %s69, 1
          %s352 = sand.u32 %s69, 1
          %s353 = smul.addr %s352, 32
          %s354 = scalar_lea.vmem [#allocation3], %s353
          %s355 = smul.addr %s24, 8
          %s356 = sadd.s32 %s25, %s355
          %s357 = smul.addr %s356, 8
          %s358 = scalar_lea.vmem %s1, %s357
          // Predicated region
          $region67: #{downsample.1} parent=65 // pred_check
            _
          $region68: #{downsample.1} parent=65 // pred_check_branch
            %360 = sbr.rel (0) target = $region70
          $region69: #{downsample.1} parent=65 // pred_region
            // Predicated region
            $region71: #{downsample.1} parent=69 // pred_check
              _
            $region72: #{downsample.1} parent=69 // pred_check_branch
              %362 = sbr.rel (0) target = $region74
            $region73: #{downsample.1} parent=69 // pred_region
              // Predicated region
              $region86: #{downsample.1} parent=73 // pred_check
                _
              $region87: #{downsample.1} parent=73 // pred_check_branch
                %384 = sbr.rel (0) target = $region89
              $region88: #{downsample.1} parent=73 // pred_region
                loop: start=0, step=1, limit=1
                $region90: #{downsample.1} parent=88 // loop_pre_header
                  _
                $region91: #{downsample.1} parent=88 // loop_header
                  %s386 = sphi 0, %s390
                  %p387 = scmp.ge.s32.totalorder %s386, 1
                  %s391 = sphi %s358, %s358
                  %s392 = sphi %s354, %s354
                $region92: #{downsample.1} parent=88 // loop_header_branch
                  %389 = sbr.rel (%p387) target = $region96
                $region93: #{downsample.1} parent=88 // loop_body
                  %v393 = vld [vmem:[%s391] sm:$0xff]
                  %394 = vst [vmem:[%s392] sm:$0xff] %v393
                  %v395 = vld [vmem:[%s391 + $0x10] sm:$0xff]
                  %396 = vst [vmem:[%s392 + $0x8] sm:$0xff] %v395
                  %v397 = vld [vmem:[%s391 + $0x20] sm:$0xff]
                  %398 = vst [vmem:[%s392 + $0x10] sm:$0xff] %v397
                  %v399 = vld [vmem:[%s391 + $0x30] sm:$0xff]
                  %400 = vst [vmem:[%s392 + $0x18] sm:$0xff] %v399
                $region94: #{downsample.1} parent=88 // loop_footer
                  %s390 = sadd.s32 1, %s386
                $region95: #{downsample.1} parent=88 // loop_footer_branch
                  %385 = sbr.rel target = $region91
                $region96: #{downsample.1} parent=88 // loop_exit
                  _
              $region89: #{downsample.1} parent=73 // pred_fallthru
                _
              // Predicated region
              $region97: #{downsample.1} parent=73 // pred_check
                _
              $region98: #{downsample.1} parent=73 // pred_check_branch
                %402 = sbr.rel target = $region100
              $region99: #{downsample.1} parent=73 // pred_region
                _
              $region100: #{downsample.1} parent=73 // pred_fallthru
                _
            $region74: #{downsample.1} parent=69 // pred_fallthru
              _
            // Predicated region
            $region75: #{downsample.1} parent=69 // pred_check
              _
            $region76: #{downsample.1} parent=69 // pred_check_branch
              %364 = sbr.rel target = $region78
            $region77: #{downsample.1} parent=69 // pred_region
              %s366 = ssub.s32 256, 1
              loop: start=0, step=1, limit=1
              $region79: #{downsample.1} parent=77 // loop_pre_header
                _
              $region80: #{downsample.1} parent=77 // loop_header
                %s368 = sphi 0, %s372
                %p369 = scmp.ge.s32.totalorder %s368, 1
                %s373 = sphi %s358, %s358
                %s374 = sphi %s354, %s354
              $region81: #{downsample.1} parent=77 // loop_header_branch
                %371 = sbr.rel (%p369) target = $region85
              $region82: #{downsample.1} parent=77 // loop_body
                %v375 = vld [vmem:[%s373] sm:%s366]
                %376 = vst [vmem:[%s374] sm:%s366] %v375
                %v377 = vld [vmem:[%s373 + $0x10] sm:%s366]
                %378 = vst [vmem:[%s374 + $0x8] sm:%s366] %v377
                %v379 = vld [vmem:[%s373 + $0x20] sm:%s366]
                %380 = vst [vmem:[%s374 + $0x10] sm:%s366] %v379
                %v381 = vld [vmem:[%s373 + $0x30] sm:%s366]
                %382 = vst [vmem:[%s374 + $0x18] sm:%s366] %v381
              $region83: #{downsample.1} parent=77 // loop_footer
                %s372 = sadd.s32 1, %s368
              $region84: #{downsample.1} parent=77 // loop_footer_branch
                %367 = sbr.rel target = $region80
              $region85: #{downsample.1} parent=77 // loop_exit
                _
            $region78: #{downsample.1} parent=69 // pred_fallthru
              _
          $region70: #{downsample.1} parent=65 // pred_fallthru
            _
          %403 = vnop
        $region66: #{downsample.1} parent=23 // pred_fallthru
          _
        // Predicated region
        $region101: #{downsample.1} parent=23 // pred_check
          %p404 = pneg %p107
        $region102: #{downsample.1} parent=23 // pred_check_branch
          %406 = sbr.rel (%p404) target = $region104
        $region103: #{downsample.1} parent=23 // pred_region
          %p407 = scmp.lt.s32.totalorder %s24, 1
          %s408 = scalar_select %p407, %s24, 1
          %p409 = scmp.lt.s32.totalorder %s25, 0
          %s410 = scalar_select %p409, %s25, 0
          %s411 = smul.addr %s408, 4
          %s412 = sadd.s32 %s410, %s411
          %s413 = smul.addr %s412, 8
          %s414 = scalar_lea.vmem %s2, %s413
        $region104: #{downsample.1} parent=23 // pred_fallthru
          _
        // Predicated region
        $region105: #{downsample.1} parent=23 // pred_check
          %p415 = pneg %p135
        $region106: #{downsample.1} parent=23 // pred_check_branch
          %417 = sbr.rel (%p415) target = $region108
        $region107: #{downsample.1} parent=23 // pred_region
          %p418 = scmp.lt.s32.totalorder %s24, 1
          %s419 = scalar_select %p418, %s24, 1
          %p420 = scmp.lt.s32.totalorder %s25, 0
          %s421 = scalar_select %p420, %s25, 0
          %s422 = smul.addr %s419, 4
          %s423 = sadd.s32 %s421, %s422
          %s424 = smul.addr %s423, 8
          %s425 = scalar_lea.vmem %s3, %s424
        $region108: #{downsample.1} parent=23 // pred_fallthru
          _
        // Predicated region
        $region109: #{downsample.1} parent=23 // pred_check
          %p426 = pneg %p163
        $region110: #{downsample.1} parent=23 // pred_check_branch
          %428 = sbr.rel (%p426) target = $region112
        $region111: #{downsample.1} parent=23 // pred_region
          %p429 = scmp.lt.s32.totalorder %s24, 1
          %s430 = scalar_select %p429, %s24, 1
          %p431 = scmp.lt.s32.totalorder %s25, 0
          %s432 = scalar_select %p431, %s25, 0
          %s433 = sadd.s32 %s432, %s430
          %s434 = smul.addr %s433, 4
          %s435 = scalar_lea.vmem %s4, %s434
        $region112: #{downsample.1} parent=23 // pred_fallthru
          _
        // Predicated region
        $region113: #{downsample.1} parent=23 // pred_check
          %p436 = pneg %p191
        $region114: #{downsample.1} parent=23 // pred_check_branch
          %438 = sbr.rel (%p436) target = $region116
        $region115: #{downsample.1} parent=23 // pred_region
          %p439 = scmp.lt.s32.totalorder %s24, 1
          %s440 = scalar_select %p439, %s24, 1
          %p441 = scmp.lt.s32.totalorder %s25, 0
          %s442 = scalar_select %p441, %s25, 0
          %s443 = sadd.s32 %s442, %s440
          %s444 = smul.addr %s443, 4
          %s445 = scalar_lea.vmem %s5, %s444
        $region116: #{downsample.1} parent=23 // pred_fallthru
          _
      $region24: #{downsample.1} parent=5 // pred_fallthru
        _
      %p446 = scmp.le.s32.totalorder 1, %s17
      %p447 = scmp.lt.s32.totalorder %s17, 3
      %p448 = pnand %p446, %p447
      %p449 = pneg %p448
      // Predicated region
      $region117: #{downsample.1} parent=5 // pred_check
        _
      $region118: #{downsample.1} parent=5 // pred_check_branch
        %451 = sbr.rel (%p448) target = $region120
      $region119: #{downsample.1} parent=5 // pred_region
        %s452 = ssub.s32 %s17, 1
        %s453 = sand.u32 %s44, 1
        %s454 = sand.u32 %s44, 1
        %s455 = smul.addr %s454, 32
        %s456 = scalar_lea.vmem [#allocation2], %s455
        // Predicated region
        $region121: #{downsample.1} parent=119 // pred_check
          %p457 = pneg %p57
        $region122: #{downsample.1} parent=119 // pred_check_branch
          %459 = sbr.rel (%p457) target = $region124
        $region123: #{downsample.1} parent=119 // pred_region
          _
        $region124: #{downsample.1} parent=119 // pred_fallthru
          _
        %s460 = sand.u32 %s72, 1
        %s461 = sand.u32 %s72, 1
        %s462 = smul.addr %s461, 32
        %s463 = scalar_lea.vmem [#allocation3], %s462
        // Predicated region
        $region125: #{downsample.1} parent=119 // pred_check
          %p464 = pneg %p85
        $region126: #{downsample.1} parent=119 // pred_check_branch
          %466 = sbr.rel (%p464) target = $region128
        $region127: #{downsample.1} parent=119 // pred_region
          _
        $region128: #{downsample.1} parent=119 // pred_fallthru
          _
        %s467 = sand.u32 %s44, 1
        %s468 = sand.u32 %s44, 1
        %s469 = smul.addr %s468, 32
        %s470 = scalar_lea.vmem [#allocation2], %s469
        %p471 = pneg %p57
        %p472 = pneg %p54
        %s473 = sand.u32 %s72, 1
        %s474 = sand.u32 %s72, 1
        %s475 = smul.addr %s474, 32
        %s476 = scalar_lea.vmem [#allocation3], %s475
        %p477 = pneg %p85
        %p478 = pneg %p82
        %p479 = scmp.lt.s32.totalorder %s26, 1
        %s480 = scalar_select %p479, %s26, 1
        %p481 = scmp.lt.s32.totalorder %s27, 0
        %s482 = scalar_select %p481, %s27, 0
        %s483 = smul.addr %s480, 4
        %s484 = sadd.s32 %s482, %s483
        %s485 = smul.addr %s484, 8
        %s486 = scalar_lea.vmem %s2, %s485
        %p487 = pneg %p113
        %p488 = pneg %p110
        %p489 = scmp.lt.s32.totalorder %s26, 1
        %s490 = scalar_select %p489, %s26, 1
        %p491 = scmp.lt.s32.totalorder %s27, 0
        %s492 = scalar_select %p491, %s27, 0
        %s493 = smul.addr %s490, 4
        %s494 = sadd.s32 %s492, %s493
        %s495 = smul.addr %s494, 8
        %s496 = scalar_lea.vmem %s3, %s495
        %p497 = pneg %p141
        %p498 = pneg %p138
        %p499 = scmp.lt.s32.totalorder %s26, 1
        %s500 = scalar_select %p499, %s26, 1
        %p501 = scmp.lt.s32.totalorder %s27, 0
        %s502 = scalar_select %p501, %s27, 0
        %s503 = sadd.s32 %s502, %s500
        %s504 = smul.addr %s503, 4
        %s505 = scalar_lea.vmem %s4, %s504
        %p506 = pneg %p169
        %p507 = pneg %p166
        %p508 = scmp.lt.s32.totalorder %s26, 1
        %s509 = scalar_select %p508, %s26, 1
        %p510 = scmp.lt.s32.totalorder %s27, 0
        %s511 = scalar_select %p510, %s27, 0
        %s512 = sadd.s32 %s511, %s509
        %s513 = smul.addr %s512, 4
        %s514 = scalar_lea.vmem %s5, %s513
        %p515 = pneg %p197
        %p516 = pneg %p194
        %p517 = pneg %p218
        %p518 = pneg %p215
        %p519 = pneg %p239
        %p520 = pneg %p236
        %p521 = pneg %p267
        %p522 = pneg %p264
        %s523 = sand.u32 %s254, 1
        %s524 = scalar_lea.sflag [#allocation5], %s523
        %s525 = sand.u32 %s254, 1
        %s526 = smul.addr %s525, 32
        %s527 = scalar_lea.vmem [#allocation4], %s526
        %p528 = scmp.lt.s32.totalorder %s26, 1
        %s529 = scalar_select %p528, %s26, 1
        %p530 = scmp.lt.s32.totalorder %s27, 0
        %s531 = scalar_select %p530, %s27, 0
        %s532 = smul.addr %s529, 4
        %s533 = sadd.s32 %s531, %s532
        %s534 = smul.addr %s533, 8
        %s535 = scalar_lea.vmem %s2, %s534
        %p536 = scmp.lt.s32.totalorder %s26, 1
        %s537 = scalar_select %p536, %s26, 1
        %p538 = scmp.lt.s32.totalorder %s27, 0
        %s539 = scalar_select %p538, %s27, 0
        %s540 = smul.addr %s537, 4
        %s541 = sadd.s32 %s539, %s540
        %s542 = smul.addr %s541, 8
        %s543 = scalar_lea.vmem %s3, %s542
        %p544 = scmp.lt.s32.totalorder %s26, 1
        %s545 = scalar_select %p544, %s26, 1
        %p546 = scmp.lt.s32.totalorder %s27, 0
        %s547 = scalar_select %p546, %s27, 0
        %s548 = sadd.s32 %s547, %s545
        %s549 = smul.addr %s548, 4
        %s550 = scalar_lea.vmem %s4, %s549
        %p551 = scmp.lt.s32.totalorder %s26, 1
        %s552 = scalar_select %p551, %s26, 1
        %p553 = scmp.lt.s32.totalorder %s27, 0
        %s554 = scalar_select %p553, %s27, 0
        %s555 = sadd.s32 %s554, %s552
        %s556 = smul.addr %s555, 4
        %s557 = scalar_lea.vmem %s5, %s556
        %v558 = vld [vmem:[%s6] sm:$0xf]
        %v559 = vld [vmem:[%s7] sm:$0xf]
        %v560 = vld [vmem:[%s550] sm:$0xf]
        %v561 = vld [vmem:[%s557] sm:$0xf]
        %v562 = vld [vmem:[%s456] sm:$0x1]
        %v563 = vld [vmem:[%s456 + $0x8] sm:$0x1]
        %v564 = vld [vmem:[%s456 + $0x10] sm:$0x1]
        %v565 = vld [vmem:[%s456 + $0x18] sm:$0x1]
        %v566 = vld [vmem:[%s456 + $0x1] sm:$0x1]
        %v567 = vld [vmem:[%s456 + $0x9] sm:$0x1]
        %v568 = vld [vmem:[%s456 + $0x11] sm:$0x1]
        %v569 = vld [vmem:[%s456 + $0x19] sm:$0x1]
        %v570 = vld [vmem:[%s463] sm:$0x1]
        %v571 = vld [vmem:[%s463 + $0x8] sm:$0x1]
        %v572 = vld [vmem:[%s463 + $0x10] sm:$0x1]
        %v573 = vld [vmem:[%s463 + $0x18] sm:$0x1]
        %v574 = vld [vmem:[%s463 + $0x1] sm:$0x1]
        %v575 = vld [vmem:[%s463 + $0x9] sm:$0x1]
        %v576 = vld [vmem:[%s463 + $0x11] sm:$0x1]
        %v577 = vld [vmem:[%s463 + $0x19] sm:$0x1]
        %v578 = vld [vmem:[%s535] sm:$0x1]
        %v579 = vld [vmem:[%s535 + $0x8] sm:$0x1]
        %v580 = vld [vmem:[%s535 + $0x10] sm:$0x1]
        %v581 = vld [vmem:[%s535 + $0x18] sm:$0x1]
        %v582 = vld [vmem:[%s543] sm:$0x1]
        %v583 = vld [vmem:[%s543 + $0x8] sm:$0x1]
        %v584 = vld [vmem:[%s543 + $0x10] sm:$0x1]
        %v585 = vld [vmem:[%s543 + $0x18] sm:$0x1]
        %v590 = vrot.slane %v563, 7
        %vm591 = vcmask 1041409
        %v592 = vsel %vm591, %v590, %v562
        %v593 = vrot.slane %v564, 6
        %vm594 = vcmask 1042434
        %v595 = vsel %vm594, %v593, %v592
        %v596 = vrot.slane %v565, 5
        %vm597 = vcmask 1043459
        %v598 = vsel %vm597, %v596, %v595
        %v604 = vrot.slane %v570, 4
        %v605 = vrot.slane %v571, 3
        %vm606 = vcmask 1045509
        %v607 = vsel %vm606, %v605, %v604
        %v608 = vrot.slane %v572, 2
        %vm609 = vcmask 1046534
        %v610 = vsel %vm609, %v608, %v607
        %v611 = vrot.slane %v573, 1
        %vm612 = vcmask 1047559
        %v613 = vsel %vm612, %v611, %v610
        %615 = vrot.lane.b32.xlu0 %v598, 127
        %v616 = vpop.permute.xlu0 %615
        %v622 = vrot.slane %v578, 4
        %v623 = vrot.slane %v579, 3
        %v624 = vsel %vm606, %v623, %v622
        %v625 = vrot.slane %v580, 2
        %v626 = vsel %vm609, %v625, %v624
        %v627 = vrot.slane %v581, 1
        %v628 = vsel %vm612, %v627, %v626
        %v634 = vrot.slane %v583, 7
        %v635 = vsel %vm591, %v634, %v582
        %v636 = vrot.slane %v584, 6
        %v637 = vsel %vm594, %v636, %v635
        %v638 = vrot.slane %v585, 5
        %v639 = vsel %vm597, %v638, %v637
        %641 = vrot.lane.b32.xlu0 %v628, 127
        %v642 = vpop.permute.xlu0 %641
        %v648 = vrot.slane %v567, 7
        %v649 = vsel %vm591, %v648, %v566
        %v650 = vrot.slane %v568, 6
        %v651 = vsel %vm594, %v650, %v649
        %v652 = vrot.slane %v569, 5
        %v653 = vsel %vm597, %v652, %v651
        %v659 = vrot.slane %v574, 4
        %v660 = vrot.slane %v575, 3
        %v661 = vsel %vm606, %v660, %v659
        %v662 = vrot.slane %v576, 2
        %v663 = vsel %vm609, %v662, %v661
        %v664 = vrot.slane %v577, 1
        %v665 = vsel %vm612, %v664, %v663
        %667 = vrot.lane.b32.xlu0 %v653, 127
        %v668 = vpop.permute.xlu0 %667
        %vm669 = vcmask 1043456
        %v670 = vsel %vm669, %v598, %v613
        %v671 = vsel %vm669, %v616, %v628
        %v672 = vsel %vm669, %v639, %v642
        %v673 = vsel %vm669, %v653, %v665
        %675 = vset.pattern.permute.xlu0 0
        %676 = vperm.xlu0 %675, %v559
        %v677 = vpop.permute.xlu0 %676
        %vm679 = vcmask 293888
        %v681 = vsel %vm679, %v558, 0
        %v683 = vsel %vm669, %v668, 0
        %685 = vmatprep.subr.mxu0 0.0
        %686 = vmatpush1.msra.mxu0 0.0
        %687 = vmatprep.subr.mxu0 0.0
        %688 = vmatpush1.msra.mxu0 0.0
        %689 = vmatprep.subr.mxu0 0.0
        %690 = vmatpush1.msra.mxu0 0.0
        %691 = vmatprep.subr.mxu0 0.0
        %692 = vmatpush1.msra.mxu0 0.0
        %693 = vmatprep.subr.mxu0 0.0
        %694 = vmatpush1.msra.mxu0 0.0
        %695 = vmatprep.subr.mxu0 0.0
        %696 = vmatpush1.msra.mxu0 0.0
        %697 = vmatprep.subr.mxu0 0.0
        %698 = vmatpush1.msra.mxu0 0.0
        %699 = vmatprep.subr.mxu0 0.0
        %700 = vmatpush1.msra.mxu0 0.0
        %701 = vmatprep.subr.mxu0 0.0
        %702 = vmatpush1.msra.mxu0 0.0
        %703 = vmatprep.subr.mxu0 0.0
        %704 = vmatpush1.msra.mxu0 0.0
        %705 = vmatprep.subr.mxu0 0.0
        %706 = vmatpush1.msra.mxu0 0.0
        %707 = vmatprep.subr.mxu0 0.0
        %708 = vmatpush1.msra.mxu0 %v683
        %709 = vmatprep.subr.mxu0 0.0
        %710 = vmatpush1.msra.mxu0 %v673
        %711 = vmatprep.subr.mxu0 0.0
        %712 = vmatpush1.msra.mxu0 %v672
        %713 = vmatprep.subr.mxu0 0.0
        %714 = vmatpush1.msra.mxu0 %v671
        %715 = vmatprep.subr.mxu0 0.0
        %716 = vmatpush1.msra.mxu0 %v670
        %717 = vmatprep.subr.mxu0 0.0
        %718 = vmatpush2.msra.mxu0 0.0
        %719 = vmatprep.subr.mxu0 0.0
        %720 = vmatpush2.msra.mxu0 0.0
        %721 = vmatprep.subr.mxu0 0.0
        %722 = vmatpush2.msra.mxu0 0.0
        %723 = vmatprep.subr.mxu0 0.0
        %724 = vmatpush2.msra.mxu0 0.0
        %725 = vmatprep.subr.mxu0 0.0
        %726 = vmatpush2.msra.mxu0 0.0
        %727 = vmatprep.subr.mxu0 0.0
        %728 = vmatpush2.msra.mxu0 0.0
        %729 = vmatprep.subr.mxu0 0.0
        %730 = vmatpush2.msra.mxu0 0.0
        %731 = vmatprep.subr.mxu0 0.0
        %732 = vmatpush2.msra.mxu0 0.0
        %733 = vmatprep.subr.mxu0 0.0
        %734 = vmatpush2.msra.mxu0 0.0
        %735 = vmatprep.subr.mxu0 0.0
        %736 = vmatpush2.msra.mxu0 0.0
        %737 = vmatprep.subr.mxu0 0.0
        %738 = vmatpush2.msra.mxu0 0.0
        %739 = vmatprep.subr.mxu0 0.0
        %740 = vmatpush2.msra.mxu0 0.0
        %741 = vmatprep.subr.mxu0 0.0
        %742 = vmatpush2.msra.mxu0 0.0
        %743 = vmatprep.subr.mxu0 0.0
        %744 = vmatpush2.msra.mxu0 0.0
        %745 = vmatprep.subr.mxu0 0.0
        %746 = vmatpush2.msra.mxu0 0.0
        %747 = vmatprep.subr.mxu0 0.0
        %748 = vmatpush2.msra.mxu0 0.0
        %749 = vmatprep.mubr.f32.mxu0 0.0
        %750 = vmatmul.mubr.f32.gmra.mxu0 %v681
        %v751 = vpop.f32.mrf.mxu0
        %v752 = vadd.f32 %v677, %v751
        %v753 = vpop.f32.mrf.mxu0
        %754 = vdwg.mxu0
        %v757 = vunpack.c.l.s4 1966171168
        %v758 = vunpack.c.0.s8 %v757
        %v759 = vlaneseq
        %v760 = vshrl.u32 %v759, 7
        %v761 = vsub.s32 %v758, %v760
        %v762 = vrot.slane %v752, %v761
        %v763 = vcombine.high %v762, %v762
        %v765 = vunpack.c.l.s4 1966171168
        %v766 = vunpack.c.0.s8 %v765
        %v767 = vlaneseq
        %v768 = vshrl.u32 %v767, 7
        %v769 = vsub.s32 %v766, %v768
        %v770 = vrot.slane %v762, %v769
        %v772 = vunpack.c.l.s4 1966171168
        %v773 = vunpack.c.0.s8 %v772
        %v774 = vlaneseq
        %v775 = vshrl.u32 %v774, 7
        %v776 = vsub.s32 %v773, %v775
        %v777 = vrot.slane %v763, %v776
        %v778 = vcombine.high %v770, %v770
        %v779 = vcombine.high %v777, %v777
        %vm784 = vcmask 57344
        %785 = vst.msk [vmem:[%s527] sm:$0x1] %vm784, %v770
        %786 = vst.msk [vmem:[%s527 + $0x8] sm:$0x1] %vm784, %v777
        %787 = vst.msk [vmem:[%s527 + $0x10] sm:$0x1] %vm784, %v778
        %788 = vst.msk [vmem:[%s527 + $0x18] sm:$0x1] %vm784, %v779
        %v789 = vld [vmem:[%s456 + $0x1] sm:$0x1]
        %v790 = vld [vmem:[%s456 + $0x9] sm:$0x1]
        %v791 = vld [vmem:[%s456 + $0x11] sm:$0x1]
        %v792 = vld [vmem:[%s456 + $0x19] sm:$0x1]
        %v793 = vld [vmem:[%s456 + $0x2] sm:$0x1]
        %v794 = vld [vmem:[%s456 + $0xa] sm:$0x1]
        %v795 = vld [vmem:[%s456 + $0x12] sm:$0x1]
        %v796 = vld [vmem:[%s456 + $0x1a] sm:$0x1]
        %v797 = vld [vmem:[%s463 + $0x1] sm:$0x1]
        %v798 = vld [vmem:[%s463 + $0x9] sm:$0x1]
        %v799 = vld [vmem:[%s463 + $0x11] sm:$0x1]
        %v800 = vld [vmem:[%s463 + $0x19] sm:$0x1]
        %v801 = vld [vmem:[%s463 + $0x2] sm:$0x1]
        %v802 = vld [vmem:[%s463 + $0xa] sm:$0x1]
        %v803 = vld [vmem:[%s463 + $0x12] sm:$0x1]
        %v804 = vld [vmem:[%s463 + $0x1a] sm:$0x1]
        %v805 = vld [vmem:[%s535 + $0x1] sm:$0x1]
        %v806 = vld [vmem:[%s535 + $0x9] sm:$0x1]
        %v807 = vld [vmem:[%s535 + $0x11] sm:$0x1]
        %v808 = vld [vmem:[%s535 + $0x19] sm:$0x1]
        %v809 = vld [vmem:[%s543 + $0x1] sm:$0x1]
        %v810 = vld [vmem:[%s543 + $0x9] sm:$0x1]
        %v811 = vld [vmem:[%s543 + $0x11] sm:$0x1]
        %v812 = vld [vmem:[%s543 + $0x19] sm:$0x1]
        %v817 = vrot.slane %v790, 7
        %v818 = vsel %vm591, %v817, %v789
        %v819 = vrot.slane %v791, 6
        %v820 = vsel %vm594, %v819, %v818
        %v821 = vrot.slane %v792, 5
        %v822 = vsel %vm597, %v821, %v820
        %v828 = vrot.slane %v797, 4
        %v829 = vrot.slane %v798, 3
        %v830 = vsel %vm606, %v829, %v828
        %v831 = vrot.slane %v799, 2
        %v832 = vsel %vm609, %v831, %v830
        %v833 = vrot.slane %v800, 1
        %v834 = vsel %vm612, %v833, %v832
        %836 = vrot.lane.b32.xlu0 %v822, 127
        %v837 = vpop.permute.xlu0 %836
        %v843 = vrot.slane %v805, 4
        %v844 = vrot.slane %v806, 3
        %v845 = vsel %vm606, %v844, %v843
        %v846 = vrot.slane %v807, 2
        %v847 = vsel %vm609, %v846, %v845
        %v848 = vrot.slane %v808, 1
        %v849 = vsel %vm612, %v848, %v847
        %v855 = vrot.slane %v810, 7
        %v856 = vsel %vm591, %v855, %v809
        %v857 = vrot.slane %v811, 6
        %v858 = vsel %vm594, %v857, %v856
        %v859 = vrot.slane %v812, 5
        %v860 = vsel %vm597, %v859, %v858
        %862 = vrot.lane.b32.xlu0 %v849, 127
        %v863 = vpop.permute.xlu0 %862
        %v869 = vrot.slane %v794, 7
        %v870 = vsel %vm591, %v869, %v793
        %v871 = vrot.slane %v795, 6
        %v872 = vsel %vm594, %v871, %v870
        %v873 = vrot.slane %v796, 5
        %v874 = vsel %vm597, %v873, %v872
        %v880 = vrot.slane %v801, 4
        %v881 = vrot.slane %v802, 3
        %v882 = vsel %vm606, %v881, %v880
        %v883 = vrot.slane %v803, 2
        %v884 = vsel %vm609, %v883, %v882
        %v885 = vrot.slane %v804, 1
        %v886 = vsel %vm612, %v885, %v884
        %888 = vrot.lane.b32.xlu0 %v874, 127
        %v889 = vpop.permute.xlu0 %888
        %v890 = vsel %vm669, %v822, %v834
        %v891 = vsel %vm669, %v837, %v849
        %v892 = vsel %vm669, %v860, %v863
        %v893 = vsel %vm669, %v874, %v886
        %v894 = vsel %vm669, %v889, 0
        %896 = vmatprep.subr.mxu0 0.0
        %897 = vmatpush1.msra.mxu0 0.0
        %898 = vmatprep.subr.mxu0 0.0
        %899 = vmatpush1.msra.mxu0 0.0
        %900 = vmatprep.subr.mxu0 0.0
        %901 = vmatpush1.msra.mxu0 0.0
        %902 = vmatprep.subr.mxu0 0.0
        %903 = vmatpush1.msra.mxu0 0.0
        %904 = vmatprep.subr.mxu0 0.0
        %905 = vmatpush1.msra.mxu0 0.0
        %906 = vmatprep.subr.mxu0 0.0
        %907 = vmatpush1.msra.mxu0 0.0
        %908 = vmatprep.subr.mxu0 0.0
        %909 = vmatpush1.msra.mxu0 0.0
        %910 = vmatprep.subr.mxu0 0.0
        %911 = vmatpush1.msra.mxu0 0.0
        %912 = vmatprep.subr.mxu0 0.0
        %913 = vmatpush1.msra.mxu0 0.0
        %914 = vmatprep.subr.mxu0 0.0
        %915 = vmatpush1.msra.mxu0 0.0
        %916 = vmatprep.subr.mxu0 0.0
        %917 = vmatpush1.msra.mxu0 0.0
        %918 = vmatprep.subr.mxu0 0.0
        %919 = vmatpush1.msra.mxu0 %v894
        %920 = vmatprep.subr.mxu0 0.0
        %921 = vmatpush1.msra.mxu0 %v893
        %922 = vmatprep.subr.mxu0 0.0
        %923 = vmatpush1.msra.mxu0 %v892
        %924 = vmatprep.subr.mxu0 0.0
        %925 = vmatpush1.msra.mxu0 %v891
        %926 = vmatprep.subr.mxu0 0.0
        %927 = vmatpush1.msra.mxu0 %v890
        %928 = vmatprep.subr.mxu0 0.0
        %929 = vmatpush2.msra.mxu0 0.0
        %930 = vmatprep.subr.mxu0 0.0
        %931 = vmatpush2.msra.mxu0 0.0
        %932 = vmatprep.subr.mxu0 0.0
        %933 = vmatpush2.msra.mxu0 0.0
        %934 = vmatprep.subr.mxu0 0.0
        %935 = vmatpush2.msra.mxu0 0.0
        %936 = vmatprep.subr.mxu0 0.0
        %937 = vmatpush2.msra.mxu0 0.0
        %938 = vmatprep.subr.mxu0 0.0
        %939 = vmatpush2.msra.mxu0 0.0
        %940 = vmatprep.subr.mxu0 0.0
        %941 = vmatpush2.msra.mxu0 0.0
        %942 = vmatprep.subr.mxu0 0.0
        %943 = vmatpush2.msra.mxu0 0.0
        %944 = vmatprep.subr.mxu0 0.0
        %945 = vmatpush2.msra.mxu0 0.0
        %946 = vmatprep.subr.mxu0 0.0
        %947 = vmatpush2.msra.mxu0 0.0
        %948 = vmatprep.subr.mxu0 0.0
        %949 = vmatpush2.msra.mxu0 0.0
        %950 = vmatprep.subr.mxu0 0.0
        %951 = vmatpush2.msra.mxu0 0.0
        %952 = vmatprep.subr.mxu0 0.0
        %953 = vmatpush2.msra.mxu0 0.0
        %954 = vmatprep.subr.mxu0 0.0
        %955 = vmatpush2.msra.mxu0 0.0
        %956 = vmatprep.subr.mxu0 0.0
        %957 = vmatpush2.msra.mxu0 0.0
        %958 = vmatprep.subr.mxu0 0.0
        %959 = vmatpush2.msra.mxu0 0.0
        %960 = vmatprep.mubr.f32.mxu0 0.0
        %961 = vmatmul.mubr.f32.gmra.mxu0 %v681
        %v962 = vpop.f32.mrf.mxu0
        %v963 = vadd.f32 %v677, %v962
        %v964 = vpop.f32.mrf.mxu0
        %965 = vdwg.mxu0
        %v968 = vunpack.c.l.s4 1966171168
        %v969 = vunpack.c.0.s8 %v968
        %v970 = vlaneseq
        %v971 = vshrl.u32 %v970, 7
        %v972 = vsub.s32 %v969, %v971
        %v973 = vrot.slane %v963, %v972
        %v974 = vcombine.high %v973, %v973
        %v976 = vunpack.c.l.s4 1966171168
        %v977 = vunpack.c.0.s8 %v976
        %v978 = vlaneseq
        %v979 = vshrl.u32 %v978, 7
        %v980 = vsub.s32 %v977, %v979
        %v981 = vrot.slane %v973, %v980
        %v983 = vunpack.c.l.s4 1966171168
        %v984 = vunpack.c.0.s8 %v983
        %v985 = vlaneseq
        %v986 = vshrl.u32 %v985, 7
        %v987 = vsub.s32 %v984, %v986
        %v988 = vrot.slane %v974, %v987
        %v989 = vcombine.high %v981, %v981
        %v990 = vcombine.high %v988, %v988
        %995 = vst.msk [vmem:[%s527 + $0x1] sm:$0x1] %vm784, %v981
        %996 = vst.msk [vmem:[%s527 + $0x9] sm:$0x1] %vm784, %v988
        %997 = vst.msk [vmem:[%s527 + $0x11] sm:$0x1] %vm784, %v989
        %998 = vst.msk [vmem:[%s527 + $0x19] sm:$0x1] %vm784, %v990
        %v999 = vld [vmem:[%s456 + $0x2] sm:$0x1]
        %v1000 = vld [vmem:[%s456 + $0xa] sm:$0x1]
        %v1001 = vld [vmem:[%s456 + $0x12] sm:$0x1]
        %v1002 = vld [vmem:[%s456 + $0x1a] sm:$0x1]
        %v1003 = vld [vmem:[%s456 + $0x3] sm:$0x1]
        %v1004 = vld [vmem:[%s456 + $0xb] sm:$0x1]
        %v1005 = vld [vmem:[%s456 + $0x13] sm:$0x1]
        %v1006 = vld [vmem:[%s456 + $0x1b] sm:$0x1]
        %v1007 = vld [vmem:[%s463 + $0x2] sm:$0x1]
        %v1008 = vld [vmem:[%s463 + $0xa] sm:$0x1]
        %v1009 = vld [vmem:[%s463 + $0x12] sm:$0x1]
        %v1010 = vld [vmem:[%s463 + $0x1a] sm:$0x1]
        %v1011 = vld [vmem:[%s463 + $0x3] sm:$0x1]
        %v1012 = vld [vmem:[%s463 + $0xb] sm:$0x1]
        %v1013 = vld [vmem:[%s463 + $0x13] sm:$0x1]
        %v1014 = vld [vmem:[%s463 + $0x1b] sm:$0x1]
        %v1015 = vld [vmem:[%s535 + $0x2] sm:$0x1]
        %v1016 = vld [vmem:[%s535 + $0xa] sm:$0x1]
        %v1017 = vld [vmem:[%s535 + $0x12] sm:$0x1]
        %v1018 = vld [vmem:[%s535 + $0x1a] sm:$0x1]
        %v1019 = vld [vmem:[%s543 + $0x2] sm:$0x1]
        %v1020 = vld [vmem:[%s543 + $0xa] sm:$0x1]
        %v1021 = vld [vmem:[%s543 + $0x12] sm:$0x1]
        %v1022 = vld [vmem:[%s543 + $0x1a] sm:$0x1]
        %v1027 = vrot.slane %v1000, 7
        %v1028 = vsel %vm591, %v1027, %v999
        %v1029 = vrot.slane %v1001, 6
        %v1030 = vsel %vm594, %v1029, %v1028
        %v1031 = vrot.slane %v1002, 5
        %v1032 = vsel %vm597, %v1031, %v1030
        %v1038 = vrot.slane %v1007, 4
        %v1039 = vrot.slane %v1008, 3
        %v1040 = vsel %vm606, %v1039, %v1038
        %v1041 = vrot.slane %v1009, 2
        %v1042 = vsel %vm609, %v1041, %v1040
        %v1043 = vrot.slane %v1010, 1
        %v1044 = vsel %vm612, %v1043, %v1042
        %1046 = vrot.lane.b32.xlu0 %v1032, 127
        %v1047 = vpop.permute.xlu0 %1046
        %v1053 = vrot.slane %v1015, 4
        %v1054 = vrot.slane %v1016, 3
        %v1055 = vsel %vm606, %v1054, %v1053
        %v1056 = vrot.slane %v1017, 2
        %v1057 = vsel %vm609, %v1056, %v1055
        %v1058 = vrot.slane %v1018, 1
        %v1059 = vsel %vm612, %v1058, %v1057
        %v1065 = vrot.slane %v1020, 7
        %v1066 = vsel %vm591, %v1065, %v1019
        %v1067 = vrot.slane %v1021, 6
        %v1068 = vsel %vm594, %v1067, %v1066
        %v1069 = vrot.slane %v1022, 5
        %v1070 = vsel %vm597, %v1069, %v1068
        %1072 = vrot.lane.b32.xlu0 %v1059, 127
        %v1073 = vpop.permute.xlu0 %1072
        %v1079 = vrot.slane %v1004, 7
        %v1080 = vsel %vm591, %v1079, %v1003
        %v1081 = vrot.slane %v1005, 6
        %v1082 = vsel %vm594, %v1081, %v1080
        %v1083 = vrot.slane %v1006, 5
        %v1084 = vsel %vm597, %v1083, %v1082
        %v1090 = vrot.slane %v1011, 4
        %v1091 = vrot.slane %v1012, 3
        %v1092 = vsel %vm606, %v1091, %v1090
        %v1093 = vrot.slane %v1013, 2
        %v1094 = vsel %vm609, %v1093, %v1092
        %v1095 = vrot.slane %v1014, 1
        %v1096 = vsel %vm612, %v1095, %v1094
        %1098 = vrot.lane.b32.xlu0 %v1084, 127
        %v1099 = vpop.permute.xlu0 %1098
        %v1100 = vsel %vm669, %v1032, %v1044
        %v1101 = vsel %vm669, %v1047, %v1059
        %v1102 = vsel %vm669, %v1070, %v1073
        %v1103 = vsel %vm669, %v1084, %v1096
        %v1104 = vsel %vm669, %v1099, 0
        %1106 = vmatprep.subr.mxu0 0.0
        %1107 = vmatpush1.msra.mxu0 0.0
        %1108 = vmatprep.subr.mxu0 0.0
        %1109 = vmatpush1.msra.mxu0 0.0
        %1110 = vmatprep.subr.mxu0 0.0
        %1111 = vmatpush1.msra.mxu0 0.0
        %1112 = vmatprep.subr.mxu0 0.0
        %1113 = vmatpush1.msra.mxu0 0.0
        %1114 = vmatprep.subr.mxu0 0.0
        %1115 = vmatpush1.msra.mxu0 0.0
        %1116 = vmatprep.subr.mxu0 0.0
        %1117 = vmatpush1.msra.mxu0 0.0
        %1118 = vmatprep.subr.mxu0 0.0
        %1119 = vmatpush1.msra.mxu0 0.0
        %1120 = vmatprep.subr.mxu0 0.0
        %1121 = vmatpush1.msra.mxu0 0.0
        %1122 = vmatprep.subr.mxu0 0.0
        %1123 = vmatpush1.msra.mxu0 0.0
        %1124 = vmatprep.subr.mxu0 0.0
        %1125 = vmatpush1.msra.mxu0 0.0
        %1126 = vmatprep.subr.mxu0 0.0
        %1127 = vmatpush1.msra.mxu0 0.0
        %1128 = vmatprep.subr.mxu0 0.0
        %1129 = vmatpush1.msra.mxu0 %v1104
        %1130 = vmatprep.subr.mxu0 0.0
        %1131 = vmatpush1.msra.mxu0 %v1103
        %1132 = vmatprep.subr.mxu0 0.0
        %1133 = vmatpush1.msra.mxu0 %v1102
        %1134 = vmatprep.subr.mxu0 0.0
        %1135 = vmatpush1.msra.mxu0 %v1101
        %1136 = vmatprep.subr.mxu0 0.0
        %1137 = vmatpush1.msra.mxu0 %v1100
        %1138 = vmatprep.subr.mxu0 0.0
        %1139 = vmatpush2.msra.mxu0 0.0
        %1140 = vmatprep.subr.mxu0 0.0
        %1141 = vmatpush2.msra.mxu0 0.0
        %1142 = vmatprep.subr.mxu0 0.0
        %1143 = vmatpush2.msra.mxu0 0.0
        %1144 = vmatprep.subr.mxu0 0.0
        %1145 = vmatpush2.msra.mxu0 0.0
        %1146 = vmatprep.subr.mxu0 0.0
        %1147 = vmatpush2.msra.mxu0 0.0
        %1148 = vmatprep.subr.mxu0 0.0
        %1149 = vmatpush2.msra.mxu0 0.0
        %1150 = vmatprep.subr.mxu0 0.0
        %1151 = vmatpush2.msra.mxu0 0.0
        %1152 = vmatprep.subr.mxu0 0.0
        %1153 = vmatpush2.msra.mxu0 0.0
        %1154 = vmatprep.subr.mxu0 0.0
        %1155 = vmatpush2.msra.mxu0 0.0
        %1156 = vmatprep.subr.mxu0 0.0
        %1157 = vmatpush2.msra.mxu0 0.0
        %1158 = vmatprep.subr.mxu0 0.0
        %1159 = vmatpush2.msra.mxu0 0.0
        %1160 = vmatprep.subr.mxu0 0.0
        %1161 = vmatpush2.msra.mxu0 0.0
        %1162 = vmatprep.subr.mxu0 0.0
        %1163 = vmatpush2.msra.mxu0 0.0
        %1164 = vmatprep.subr.mxu0 0.0
        %1165 = vmatpush2.msra.mxu0 0.0
        %1166 = vmatprep.subr.mxu0 0.0
        %1167 = vmatpush2.msra.mxu0 0.0
        %1168 = vmatprep.subr.mxu0 0.0
        %1169 = vmatpush2.msra.mxu0 0.0
        %1170 = vmatprep.mubr.f32.mxu0 0.0
        %1171 = vmatmul.mubr.f32.gmra.mxu0 %v681
        %v1172 = vpop.f32.mrf.mxu0
        %v1173 = vadd.f32 %v677, %v1172
        %v1174 = vpop.f32.mrf.mxu0
        %1175 = vdwg.mxu0
        %v1178 = vunpack.c.l.s4 1966171168
        %v1179 = vunpack.c.0.s8 %v1178
        %v1180 = vlaneseq
        %v1181 = vshrl.u32 %v1180, 7
        %v1182 = vsub.s32 %v1179, %v1181
        %v1183 = vrot.slane %v1173, %v1182
        %v1184 = vcombine.high %v1183, %v1183
        %v1186 = vunpack.c.l.s4 1966171168
        %v1187 = vunpack.c.0.s8 %v1186
        %v1188 = vlaneseq
        %v1189 = vshrl.u32 %v1188, 7
        %v1190 = vsub.s32 %v1187, %v1189
        %v1191 = vrot.slane %v1183, %v1190
        %v1193 = vunpack.c.l.s4 1966171168
        %v1194 = vunpack.c.0.s8 %v1193
        %v1195 = vlaneseq
        %v1196 = vshrl.u32 %v1195, 7
        %v1197 = vsub.s32 %v1194, %v1196
        %v1198 = vrot.slane %v1184, %v1197
        %v1199 = vcombine.high %v1191, %v1191
        %v1200 = vcombine.high %v1198, %v1198
        %1205 = vst.msk [vmem:[%s527 + $0x2] sm:$0x1] %vm784, %v1191
        %1206 = vst.msk [vmem:[%s527 + $0xa] sm:$0x1] %vm784, %v1198
        %1207 = vst.msk [vmem:[%s527 + $0x12] sm:$0x1] %vm784, %v1199
        %1208 = vst.msk [vmem:[%s527 + $0x1a] sm:$0x1] %vm784, %v1200
        %v1209 = vld [vmem:[%s456 + $0x3] sm:$0x1]
        %v1210 = vld [vmem:[%s456 + $0xb] sm:$0x1]
        %v1211 = vld [vmem:[%s456 + $0x13] sm:$0x1]
        %v1212 = vld [vmem:[%s456 + $0x1b] sm:$0x1]
        %v1213 = vld [vmem:[%s456 + $0x4] sm:$0x1]
        %v1214 = vld [vmem:[%s456 + $0xc] sm:$0x1]
        %v1215 = vld [vmem:[%s456 + $0x14] sm:$0x1]
        %v1216 = vld [vmem:[%s456 + $0x1c] sm:$0x1]
        %v1217 = vld [vmem:[%s463 + $0x3] sm:$0x1]
        %v1218 = vld [vmem:[%s463 + $0xb] sm:$0x1]
        %v1219 = vld [vmem:[%s463 + $0x13] sm:$0x1]
        %v1220 = vld [vmem:[%s463 + $0x1b] sm:$0x1]
        %v1221 = vld [vmem:[%s463 + $0x4] sm:$0x1]
        %v1222 = vld [vmem:[%s463 + $0xc] sm:$0x1]
        %v1223 = vld [vmem:[%s463 + $0x14] sm:$0x1]
        %v1224 = vld [vmem:[%s463 + $0x1c] sm:$0x1]
        %v1225 = vld [vmem:[%s535 + $0x3] sm:$0x1]
        %v1226 = vld [vmem:[%s535 + $0xb] sm:$0x1]
        %v1227 = vld [vmem:[%s535 + $0x13] sm:$0x1]
        %v1228 = vld [vmem:[%s535 + $0x1b] sm:$0x1]
        %v1229 = vld [vmem:[%s543 + $0x3] sm:$0x1]
        %v1230 = vld [vmem:[%s543 + $0xb] sm:$0x1]
        %v1231 = vld [vmem:[%s543 + $0x13] sm:$0x1]
        %v1232 = vld [vmem:[%s543 + $0x1b] sm:$0x1]
        %v1237 = vrot.slane %v1210, 7
        %v1238 = vsel %vm591, %v1237, %v1209
        %v1239 = vrot.slane %v1211, 6
        %v1240 = vsel %vm594, %v1239, %v1238
        %v1241 = vrot.slane %v1212, 5
        %v1242 = vsel %vm597, %v1241, %v1240
        %v1248 = vrot.slane %v1217, 4
        %v1249 = vrot.slane %v1218, 3
        %v1250 = vsel %vm606, %v1249, %v1248
        %v1251 = vrot.slane %v1219, 2
        %v1252 = vsel %vm609, %v1251, %v1250
        %v1253 = vrot.slane %v1220, 1
        %v1254 = vsel %vm612, %v1253, %v1252
        %1256 = vrot.lane.b32.xlu0 %v1242, 127
        %v1257 = vpop.permute.xlu0 %1256
        %v1263 = vrot.slane %v1225, 4
        %v1264 = vrot.slane %v1226, 3
        %v1265 = vsel %vm606, %v1264, %v1263
        %v1266 = vrot.slane %v1227, 2
        %v1267 = vsel %vm609, %v1266, %v1265
        %v1268 = vrot.slane %v1228, 1
        %v1269 = vsel %vm612, %v1268, %v1267
        %v1275 = vrot.slane %v1230, 7
        %v1276 = vsel %vm591, %v1275, %v1229
        %v1277 = vrot.slane %v1231, 6
        %v1278 = vsel %vm594, %v1277, %v1276
        %v1279 = vrot.slane %v1232, 5
        %v1280 = vsel %vm597, %v1279, %v1278
        %1282 = vrot.lane.b32.xlu0 %v1269, 127
        %v1283 = vpop.permute.xlu0 %1282
        %v1289 = vrot.slane %v1214, 7
        %v1290 = vsel %vm591, %v1289, %v1213
        %v1291 = vrot.slane %v1215, 6
        %v1292 = vsel %vm594, %v1291, %v1290
        %v1293 = vrot.slane %v1216, 5
        %v1294 = vsel %vm597, %v1293, %v1292
        %v1300 = vrot.slane %v1221, 4
        %v1301 = vrot.slane %v1222, 3
        %v1302 = vsel %vm606, %v1301, %v1300
        %v1303 = vrot.slane %v1223, 2
        %v1304 = vsel %vm609, %v1303, %v1302
        %v1305 = vrot.slane %v1224, 1
        %v1306 = vsel %vm612, %v1305, %v1304
        %1308 = vrot.lane.b32.xlu0 %v1294, 127
        %v1309 = vpop.permute.xlu0 %1308
        %v1310 = vsel %vm669, %v1242, %v1254
        %v1311 = vsel %vm669, %v1257, %v1269
        %v1312 = vsel %vm669, %v1280, %v1283
        %v1313 = vsel %vm669, %v1294, %v1306
        %v1314 = vsel %vm669, %v1309, 0
        %1316 = vmatprep.subr.mxu0 0.0
        %1317 = vmatpush1.msra.mxu0 0.0
        %1318 = vmatprep.subr.mxu0 0.0
        %1319 = vmatpush1.msra.mxu0 0.0
        %1320 = vmatprep.subr.mxu0 0.0
        %1321 = vmatpush1.msra.mxu0 0.0
        %1322 = vmatprep.subr.mxu0 0.0
        %1323 = vmatpush1.msra.mxu0 0.0
        %1324 = vmatprep.subr.mxu0 0.0
        %1325 = vmatpush1.msra.mxu0 0.0
        %1326 = vmatprep.subr.mxu0 0.0
        %1327 = vmatpush1.msra.mxu0 0.0
        %1328 = vmatprep.subr.mxu0 0.0
        %1329 = vmatpush1.msra.mxu0 0.0
        %1330 = vmatprep.subr.mxu0 0.0
        %1331 = vmatpush1.msra.mxu0 0.0
        %1332 = vmatprep.subr.mxu0 0.0
        %1333 = vmatpush1.msra.mxu0 0.0
        %1334 = vmatprep.subr.mxu0 0.0
        %1335 = vmatpush1.msra.mxu0 0.0
        %1336 = vmatprep.subr.mxu0 0.0
        %1337 = vmatpush1.msra.mxu0 0.0
        %1338 = vmatprep.subr.mxu0 0.0
        %1339 = vmatpush1.msra.mxu0 %v1314
        %1340 = vmatprep.subr.mxu0 0.0
        %1341 = vmatpush1.msra.mxu0 %v1313
        %1342 = vmatprep.subr.mxu0 0.0
        %1343 = vmatpush1.msra.mxu0 %v1312
        %1344 = vmatprep.subr.mxu0 0.0
        %1345 = vmatpush1.msra.mxu0 %v1311
        %1346 = vmatprep.subr.mxu0 0.0
        %1347 = vmatpush1.msra.mxu0 %v1310
        %1348 = vmatprep.subr.mxu0 0.0
        %1349 = vmatpush2.msra.mxu0 0.0
        %1350 = vmatprep.subr.mxu0 0.0
        %1351 = vmatpush2.msra.mxu0 0.0
        %1352 = vmatprep.subr.mxu0 0.0
        %1353 = vmatpush2.msra.mxu0 0.0
        %1354 = vmatprep.subr.mxu0 0.0
        %1355 = vmatpush2.msra.mxu0 0.0
        %1356 = vmatprep.subr.mxu0 0.0
        %1357 = vmatpush2.msra.mxu0 0.0
        %1358 = vmatprep.subr.mxu0 0.0
        %1359 = vmatpush2.msra.mxu0 0.0
        %1360 = vmatprep.subr.mxu0 0.0
        %1361 = vmatpush2.msra.mxu0 0.0
        %1362 = vmatprep.subr.mxu0 0.0
        %1363 = vmatpush2.msra.mxu0 0.0
        %1364 = vmatprep.subr.mxu0 0.0
        %1365 = vmatpush2.msra.mxu0 0.0
        %1366 = vmatprep.subr.mxu0 0.0
        %1367 = vmatpush2.msra.mxu0 0.0
        %1368 = vmatprep.subr.mxu0 0.0
        %1369 = vmatpush2.msra.mxu0 0.0
        %1370 = vmatprep.subr.mxu0 0.0
        %1371 = vmatpush2.msra.mxu0 0.0
        %1372 = vmatprep.subr.mxu0 0.0
        %1373 = vmatpush2.msra.mxu0 0.0
        %1374 = vmatprep.subr.mxu0 0.0
        %1375 = vmatpush2.msra.mxu0 0.0
        %1376 = vmatprep.subr.mxu0 0.0
        %1377 = vmatpush2.msra.mxu0 0.0
        %1378 = vmatprep.subr.mxu0 0.0
        %1379 = vmatpush2.msra.mxu0 0.0
        %1380 = vmatprep.mubr.f32.mxu0 0.0
        %1381 = vmatmul.mubr.f32.gmra.mxu0 %v681
        %v1382 = vpop.f32.mrf.mxu0
        %v1383 = vadd.f32 %v677, %v1382
        %v1384 = vpop.f32.mrf.mxu0
        %1385 = vdwg.mxu0
        %v1388 = vunpack.c.l.s4 1966171168
        %v1389 = vunpack.c.0.s8 %v1388
        %v1390 = vlaneseq
        %v1391 = vshrl.u32 %v1390, 7
        %v1392 = vsub.s32 %v1389, %v1391
        %v1393 = vrot.slane %v1383, %v1392
        %v1394 = vcombine.high %v1393, %v1393
        %v1396 = vunpack.c.l.s4 1966171168
        %v1397 = vunpack.c.0.s8 %v1396
        %v1398 = vlaneseq
        %v1399 = vshrl.u32 %v1398, 7
        %v1400 = vsub.s32 %v1397, %v1399
        %v1401 = vrot.slane %v1393, %v1400
        %v1403 = vunpack.c.l.s4 1966171168
        %v1404 = vunpack.c.0.s8 %v1403
        %v1405 = vlaneseq
        %v1406 = vshrl.u32 %v1405, 7
        %v1407 = vsub.s32 %v1404, %v1406
        %v1408 = vrot.slane %v1394, %v1407
        %v1409 = vcombine.high %v1401, %v1401
        %v1410 = vcombine.high %v1408, %v1408
        %1415 = vst.msk [vmem:[%s527 + $0x3] sm:$0x1] %vm784, %v1401
        %1416 = vst.msk [vmem:[%s527 + $0xb] sm:$0x1] %vm784, %v1408
        %1417 = vst.msk [vmem:[%s527 + $0x13] sm:$0x1] %vm784, %v1409
        %1418 = vst.msk [vmem:[%s527 + $0x1b] sm:$0x1] %vm784, %v1410
        %v1419 = vld [vmem:[%s456 + $0x4] sm:$0x1]
        %v1420 = vld [vmem:[%s456 + $0xc] sm:$0x1]
        %v1421 = vld [vmem:[%s456 + $0x14] sm:$0x1]
        %v1422 = vld [vmem:[%s456 + $0x1c] sm:$0x1]
        %v1423 = vld [vmem:[%s456 + $0x5] sm:$0x1]
        %v1424 = vld [vmem:[%s456 + $0xd] sm:$0x1]
        %v1425 = vld [vmem:[%s456 + $0x15] sm:$0x1]
        %v1426 = vld [vmem:[%s456 + $0x1d] sm:$0x1]
        %v1427 = vld [vmem:[%s463 + $0x4] sm:$0x1]
        %v1428 = vld [vmem:[%s463 + $0xc] sm:$0x1]
        %v1429 = vld [vmem:[%s463 + $0x14] sm:$0x1]
        %v1430 = vld [vmem:[%s463 + $0x1c] sm:$0x1]
        %v1431 = vld [vmem:[%s463 + $0x5] sm:$0x1]
        %v1432 = vld [vmem:[%s463 + $0xd] sm:$0x1]
        %v1433 = vld [vmem:[%s463 + $0x15] sm:$0x1]
        %v1434 = vld [vmem:[%s463 + $0x1d] sm:$0x1]
        %v1435 = vld [vmem:[%s535 + $0x4] sm:$0x1]
        %v1436 = vld [vmem:[%s535 + $0xc] sm:$0x1]
        %v1437 = vld [vmem:[%s535 + $0x14] sm:$0x1]
        %v1438 = vld [vmem:[%s535 + $0x1c] sm:$0x1]
        %v1439 = vld [vmem:[%s543 + $0x4] sm:$0x1]
        %v1440 = vld [vmem:[%s543 + $0xc] sm:$0x1]
        %v1441 = vld [vmem:[%s543 + $0x14] sm:$0x1]
        %v1442 = vld [vmem:[%s543 + $0x1c] sm:$0x1]
        %v1447 = vrot.slane %v1420, 7
        %v1448 = vsel %vm591, %v1447, %v1419
        %v1449 = vrot.slane %v1421, 6
        %v1450 = vsel %vm594, %v1449, %v1448
        %v1451 = vrot.slane %v1422, 5
        %v1452 = vsel %vm597, %v1451, %v1450
        %v1458 = vrot.slane %v1427, 4
        %v1459 = vrot.slane %v1428, 3
        %v1460 = vsel %vm606, %v1459, %v1458
        %v1461 = vrot.slane %v1429, 2
        %v1462 = vsel %vm609, %v1461, %v1460
        %v1463 = vrot.slane %v1430, 1
        %v1464 = vsel %vm612, %v1463, %v1462
        %1466 = vrot.lane.b32.xlu0 %v1452, 127
        %v1467 = vpop.permute.xlu0 %1466
        %v1473 = vrot.slane %v1435, 4
        %v1474 = vrot.slane %v1436, 3
        %v1475 = vsel %vm606, %v1474, %v1473
        %v1476 = vrot.slane %v1437, 2
        %v1477 = vsel %vm609, %v1476, %v1475
        %v1478 = vrot.slane %v1438, 1
        %v1479 = vsel %vm612, %v1478, %v1477
        %v1485 = vrot.slane %v1440, 7
        %v1486 = vsel %vm591, %v1485, %v1439
        %v1487 = vrot.slane %v1441, 6
        %v1488 = vsel %vm594, %v1487, %v1486
        %v1489 = vrot.slane %v1442, 5
        %v1490 = vsel %vm597, %v1489, %v1488
        %1492 = vrot.lane.b32.xlu0 %v1479, 127
        %v1493 = vpop.permute.xlu0 %1492
        %v1499 = vrot.slane %v1424, 7
        %v1500 = vsel %vm591, %v1499, %v1423
        %v1501 = vrot.slane %v1425, 6
        %v1502 = vsel %vm594, %v1501, %v1500
        %v1503 = vrot.slane %v1426, 5
        %v1504 = vsel %vm597, %v1503, %v1502
        %v1510 = vrot.slane %v1431, 4
        %v1511 = vrot.slane %v1432, 3
        %v1512 = vsel %vm606, %v1511, %v1510
        %v1513 = vrot.slane %v1433, 2
        %v1514 = vsel %vm609, %v1513, %v1512
        %v1515 = vrot.slane %v1434, 1
        %v1516 = vsel %vm612, %v1515, %v1514
        %1518 = vrot.lane.b32.xlu0 %v1504, 127
        %v1519 = vpop.permute.xlu0 %1518
        %v1520 = vsel %vm669, %v1452, %v1464
        %v1521 = vsel %vm669, %v1467, %v1479
        %v1522 = vsel %vm669, %v1490, %v1493
        %v1523 = vsel %vm669, %v1504, %v1516
        %v1524 = vsel %vm669, %v1519, 0
        %1526 = vmatprep.subr.mxu0 0.0
        %1527 = vmatpush1.msra.mxu0 0.0
        %1528 = vmatprep.subr.mxu0 0.0
        %1529 = vmatpush1.msra.mxu0 0.0
        %1530 = vmatprep.subr.mxu0 0.0
        %1531 = vmatpush1.msra.mxu0 0.0
        %1532 = vmatprep.subr.mxu0 0.0
        %1533 = vmatpush1.msra.mxu0 0.0
        %1534 = vmatprep.subr.mxu0 0.0
        %1535 = vmatpush1.msra.mxu0 0.0
        %1536 = vmatprep.subr.mxu0 0.0
        %1537 = vmatpush1.msra.mxu0 0.0
        %1538 = vmatprep.subr.mxu0 0.0
        %1539 = vmatpush1.msra.mxu0 0.0
        %1540 = vmatprep.subr.mxu0 0.0
        %1541 = vmatpush1.msra.mxu0 0.0
        %1542 = vmatprep.subr.mxu0 0.0
        %1543 = vmatpush1.msra.mxu0 0.0
        %1544 = vmatprep.subr.mxu0 0.0
        %1545 = vmatpush1.msra.mxu0 0.0
        %1546 = vmatprep.subr.mxu0 0.0
        %1547 = vmatpush1.msra.mxu0 0.0
        %1548 = vmatprep.subr.mxu0 0.0
        %1549 = vmatpush1.msra.mxu0 %v1524
        %1550 = vmatprep.subr.mxu0 0.0
        %1551 = vmatpush1.msra.mxu0 %v1523
        %1552 = vmatprep.subr.mxu0 0.0
        %1553 = vmatpush1.msra.mxu0 %v1522
        %1554 = vmatprep.subr.mxu0 0.0
        %1555 = vmatpush1.msra.mxu0 %v1521
        %1556 = vmatprep.subr.mxu0 0.0
        %1557 = vmatpush1.msra.mxu0 %v1520
        %1558 = vmatprep.subr.mxu0 0.0
        %1559 = vmatpush2.msra.mxu0 0.0
        %1560 = vmatprep.subr.mxu0 0.0
        %1561 = vmatpush2.msra.mxu0 0.0
        %1562 = vmatprep.subr.mxu0 0.0
        %1563 = vmatpush2.msra.mxu0 0.0
        %1564 = vmatprep.subr.mxu0 0.0
        %1565 = vmatpush2.msra.mxu0 0.0
        %1566 = vmatprep.subr.mxu0 0.0
        %1567 = vmatpush2.msra.mxu0 0.0
        %1568 = vmatprep.subr.mxu0 0.0
        %1569 = vmatpush2.msra.mxu0 0.0
        %1570 = vmatprep.subr.mxu0 0.0
        %1571 = vmatpush2.msra.mxu0 0.0
        %1572 = vmatprep.subr.mxu0 0.0
        %1573 = vmatpush2.msra.mxu0 0.0
        %1574 = vmatprep.subr.mxu0 0.0
        %1575 = vmatpush2.msra.mxu0 0.0
        %1576 = vmatprep.subr.mxu0 0.0
        %1577 = vmatpush2.msra.mxu0 0.0
        %1578 = vmatprep.subr.mxu0 0.0
        %1579 = vmatpush2.msra.mxu0 0.0
        %1580 = vmatprep.subr.mxu0 0.0
        %1581 = vmatpush2.msra.mxu0 0.0
        %1582 = vmatprep.subr.mxu0 0.0
        %1583 = vmatpush2.msra.mxu0 0.0
        %1584 = vmatprep.subr.mxu0 0.0
        %1585 = vmatpush2.msra.mxu0 0.0
        %1586 = vmatprep.subr.mxu0 0.0
        %1587 = vmatpush2.msra.mxu0 0.0
        %1588 = vmatprep.subr.mxu0 0.0
        %1589 = vmatpush2.msra.mxu0 0.0
        %1590 = vmatprep.mubr.f32.mxu0 0.0
        %1591 = vmatmul.mubr.f32.gmra.mxu0 %v681
        %v1592 = vpop.f32.mrf.mxu0
        %v1593 = vadd.f32 %v677, %v1592
        %v1594 = vpop.f32.mrf.mxu0
        %1595 = vdwg.mxu0
        %v1598 = vunpack.c.l.s4 1966171168
        %v1599 = vunpack.c.0.s8 %v1598
        %v1600 = vlaneseq
        %v1601 = vshrl.u32 %v1600, 7
        %v1602 = vsub.s32 %v1599, %v1601
        %v1603 = vrot.slane %v1593, %v1602
        %v1604 = vcombine.high %v1603, %v1603
        %v1606 = vunpack.c.l.s4 1966171168
        %v1607 = vunpack.c.0.s8 %v1606
        %v1608 = vlaneseq
        %v1609 = vshrl.u32 %v1608, 7
        %v1610 = vsub.s32 %v1607, %v1609
        %v1611 = vrot.slane %v1603, %v1610
        %v1613 = vunpack.c.l.s4 1966171168
        %v1614 = vunpack.c.0.s8 %v1613
        %v1615 = vlaneseq
        %v1616 = vshrl.u32 %v1615, 7
        %v1617 = vsub.s32 %v1614, %v1616
        %v1618 = vrot.slane %v1604, %v1617
        %v1619 = vcombine.high %v1611, %v1611
        %v1620 = vcombine.high %v1618, %v1618
        %1625 = vst.msk [vmem:[%s527 + $0x4] sm:$0x1] %vm784, %v1611
        %1626 = vst.msk [vmem:[%s527 + $0xc] sm:$0x1] %vm784, %v1618
        %1627 = vst.msk [vmem:[%s527 + $0x14] sm:$0x1] %vm784, %v1619
        %1628 = vst.msk [vmem:[%s527 + $0x1c] sm:$0x1] %vm784, %v1620
        %v1629 = vld [vmem:[%s456 + $0x5] sm:$0x1]
        %v1630 = vld [vmem:[%s456 + $0xd] sm:$0x1]
        %v1631 = vld [vmem:[%s456 + $0x15] sm:$0x1]
        %v1632 = vld [vmem:[%s456 + $0x1d] sm:$0x1]
        %v1633 = vld [vmem:[%s456 + $0x6] sm:$0x1]
        %v1634 = vld [vmem:[%s456 + $0xe] sm:$0x1]
        %v1635 = vld [vmem:[%s456 + $0x16] sm:$0x1]
        %v1636 = vld [vmem:[%s456 + $0x1e] sm:$0x1]
        %v1637 = vld [vmem:[%s463 + $0x5] sm:$0x1]
        %v1638 = vld [vmem:[%s463 + $0xd] sm:$0x1]
        %v1639 = vld [vmem:[%s463 + $0x15] sm:$0x1]
        %v1640 = vld [vmem:[%s463 + $0x1d] sm:$0x1]
        %v1641 = vld [vmem:[%s463 + $0x6] sm:$0x1]
        %v1642 = vld [vmem:[%s463 + $0xe] sm:$0x1]
        %v1643 = vld [vmem:[%s463 + $0x16] sm:$0x1]
        %v1644 = vld [vmem:[%s463 + $0x1e] sm:$0x1]
        %v1645 = vld [vmem:[%s535 + $0x5] sm:$0x1]
        %v1646 = vld [vmem:[%s535 + $0xd] sm:$0x1]
        %v1647 = vld [vmem:[%s535 + $0x15] sm:$0x1]
        %v1648 = vld [vmem:[%s535 + $0x1d] sm:$0x1]
        %v1649 = vld [vmem:[%s543 + $0x5] sm:$0x1]
        %v1650 = vld [vmem:[%s543 + $0xd] sm:$0x1]
        %v1651 = vld [vmem:[%s543 + $0x15] sm:$0x1]
        %v1652 = vld [vmem:[%s543 + $0x1d] sm:$0x1]
        %v1657 = vrot.slane %v1630, 7
        %v1658 = vsel %vm591, %v1657, %v1629
        %v1659 = vrot.slane %v1631, 6
        %v1660 = vsel %vm594, %v1659, %v1658
        %v1661 = vrot.slane %v1632, 5
        %v1662 = vsel %vm597, %v1661, %v1660
        %v1668 = vrot.slane %v1637, 4
        %v1669 = vrot.slane %v1638, 3
        %v1670 = vsel %vm606, %v1669, %v1668
        %v1671 = vrot.slane %v1639, 2
        %v1672 = vsel %vm609, %v1671, %v1670
        %v1673 = vrot.slane %v1640, 1
        %v1674 = vsel %vm612, %v1673, %v1672
        %1676 = vrot.lane.b32.xlu0 %v1662, 127
        %v1677 = vpop.permute.xlu0 %1676
        %v1683 = vrot.slane %v1645, 4
        %v1684 = vrot.slane %v1646, 3
        %v1685 = vsel %vm606, %v1684, %v1683
        %v1686 = vrot.slane %v1647, 2
        %v1687 = vsel %vm609, %v1686, %v1685
        %v1688 = vrot.slane %v1648, 1
        %v1689 = vsel %vm612, %v1688, %v1687
        %v1695 = vrot.slane %v1650, 7
        %v1696 = vsel %vm591, %v1695, %v1649
        %v1697 = vrot.slane %v1651, 6
        %v1698 = vsel %vm594, %v1697, %v1696
        %v1699 = vrot.slane %v1652, 5
        %v1700 = vsel %vm597, %v1699, %v1698
        %1702 = vrot.lane.b32.xlu0 %v1689, 127
        %v1703 = vpop.permute.xlu0 %1702
        %v1709 = vrot.slane %v1634, 7
        %v1710 = vsel %vm591, %v1709, %v1633
        %v1711 = vrot.slane %v1635, 6
        %v1712 = vsel %vm594, %v1711, %v1710
        %v1713 = vrot.slane %v1636, 5
        %v1714 = vsel %vm597, %v1713, %v1712
        %v1720 = vrot.slane %v1641, 4
        %v1721 = vrot.slane %v1642, 3
        %v1722 = vsel %vm606, %v1721, %v1720
        %v1723 = vrot.slane %v1643, 2
        %v1724 = vsel %vm609, %v1723, %v1722
        %v1725 = vrot.slane %v1644, 1
        %v1726 = vsel %vm612, %v1725, %v1724
        %1728 = vrot.lane.b32.xlu0 %v1714, 127
        %v1729 = vpop.permute.xlu0 %1728
        %v1730 = vsel %vm669, %v1662, %v1674
        %v1731 = vsel %vm669, %v1677, %v1689
        %v1732 = vsel %vm669, %v1700, %v1703
        %v1733 = vsel %vm669, %v1714, %v1726
        %v1734 = vsel %vm669, %v1729, 0
        %1736 = vmatprep.subr.mxu0 0.0
        %1737 = vmatpush1.msra.mxu0 0.0
        %1738 = vmatprep.subr.mxu0 0.0
        %1739 = vmatpush1.msra.mxu0 0.0
        %1740 = vmatprep.subr.mxu0 0.0
        %1741 = vmatpush1.msra.mxu0 0.0
        %1742 = vmatprep.subr.mxu0 0.0
        %1743 = vmatpush1.msra.mxu0 0.0
        %1744 = vmatprep.subr.mxu0 0.0
        %1745 = vmatpush1.msra.mxu0 0.0
        %1746 = vmatprep.subr.mxu0 0.0
        %1747 = vmatpush1.msra.mxu0 0.0
        %1748 = vmatprep.subr.mxu0 0.0
        %1749 = vmatpush1.msra.mxu0 0.0
        %1750 = vmatprep.subr.mxu0 0.0
        %1751 = vmatpush1.msra.mxu0 0.0
        %1752 = vmatprep.subr.mxu0 0.0
        %1753 = vmatpush1.msra.mxu0 0.0
        %1754 = vmatprep.subr.mxu0 0.0
        %1755 = vmatpush1.msra.mxu0 0.0
        %1756 = vmatprep.subr.mxu0 0.0
        %1757 = vmatpush1.msra.mxu0 0.0
        %1758 = vmatprep.subr.mxu0 0.0
        %1759 = vmatpush1.msra.mxu0 %v1734
        %1760 = vmatprep.subr.mxu0 0.0
        %1761 = vmatpush1.msra.mxu0 %v1733
        %1762 = vmatprep.subr.mxu0 0.0
        %1763 = vmatpush1.msra.mxu0 %v1732
        %1764 = vmatprep.subr.mxu0 0.0
        %1765 = vmatpush1.msra.mxu0 %v1731
        %1766 = vmatprep.subr.mxu0 0.0
        %1767 = vmatpush1.msra.mxu0 %v1730
        %1768 = vmatprep.subr.mxu0 0.0
        %1769 = vmatpush2.msra.mxu0 0.0
        %1770 = vmatprep.subr.mxu0 0.0
        %1771 = vmatpush2.msra.mxu0 0.0
        %1772 = vmatprep.subr.mxu0 0.0
        %1773 = vmatpush2.msra.mxu0 0.0
        %1774 = vmatprep.subr.mxu0 0.0
        %1775 = vmatpush2.msra.mxu0 0.0
        %1776 = vmatprep.subr.mxu0 0.0
        %1777 = vmatpush2.msra.mxu0 0.0
        %1778 = vmatprep.subr.mxu0 0.0
        %1779 = vmatpush2.msra.mxu0 0.0
        %1780 = vmatprep.subr.mxu0 0.0
        %1781 = vmatpush2.msra.mxu0 0.0
        %1782 = vmatprep.subr.mxu0 0.0
        %1783 = vmatpush2.msra.mxu0 0.0
        %1784 = vmatprep.subr.mxu0 0.0
        %1785 = vmatpush2.msra.mxu0 0.0
        %1786 = vmatprep.subr.mxu0 0.0
        %1787 = vmatpush2.msra.mxu0 0.0
        %1788 = vmatprep.subr.mxu0 0.0
        %1789 = vmatpush2.msra.mxu0 0.0
        %1790 = vmatprep.subr.mxu0 0.0
        %1791 = vmatpush2.msra.mxu0 0.0
        %1792 = vmatprep.subr.mxu0 0.0
        %1793 = vmatpush2.msra.mxu0 0.0
        %1794 = vmatprep.subr.mxu0 0.0
        %1795 = vmatpush2.msra.mxu0 0.0
        %1796 = vmatprep.subr.mxu0 0.0
        %1797 = vmatpush2.msra.mxu0 0.0
        %1798 = vmatprep.subr.mxu0 0.0
        %1799 = vmatpush2.msra.mxu0 0.0
        %1800 = vmatprep.mubr.f32.mxu0 0.0
        %1801 = vmatmul.mubr.f32.gmra.mxu0 %v681
        %v1802 = vpop.f32.mrf.mxu0
        %v1803 = vadd.f32 %v677, %v1802
        %v1804 = vpop.f32.mrf.mxu0
        %1805 = vdwg.mxu0
        %v1808 = vunpack.c.l.s4 1966171168
        %v1809 = vunpack.c.0.s8 %v1808
        %v1810 = vlaneseq
        %v1811 = vshrl.u32 %v1810, 7
        %v1812 = vsub.s32 %v1809, %v1811
        %v1813 = vrot.slane %v1803, %v1812
        %v1814 = vcombine.high %v1813, %v1813
        %v1816 = vunpack.c.l.s4 1966171168
        %v1817 = vunpack.c.0.s8 %v1816
        %v1818 = vlaneseq
        %v1819 = vshrl.u32 %v1818, 7
        %v1820 = vsub.s32 %v1817, %v1819
        %v1821 = vrot.slane %v1813, %v1820
        %v1823 = vunpack.c.l.s4 1966171168
        %v1824 = vunpack.c.0.s8 %v1823
        %v1825 = vlaneseq
        %v1826 = vshrl.u32 %v1825, 7
        %v1827 = vsub.s32 %v1824, %v1826
        %v1828 = vrot.slane %v1814, %v1827
        %v1829 = vcombine.high %v1821, %v1821
        %v1830 = vcombine.high %v1828, %v1828
        %1835 = vst.msk [vmem:[%s527 + $0x5] sm:$0x1] %vm784, %v1821
        %1836 = vst.msk [vmem:[%s527 + $0xd] sm:$0x1] %vm784, %v1828
        %1837 = vst.msk [vmem:[%s527 + $0x15] sm:$0x1] %vm784, %v1829
        %1838 = vst.msk [vmem:[%s527 + $0x1d] sm:$0x1] %vm784, %v1830
        %v1839 = vld [vmem:[%s456 + $0x6] sm:$0x1]
        %v1840 = vld [vmem:[%s456 + $0xe] sm:$0x1]
        %v1841 = vld [vmem:[%s456 + $0x16] sm:$0x1]
        %v1842 = vld [vmem:[%s456 + $0x1e] sm:$0x1]
        %v1843 = vld [vmem:[%s456 + $0x7] sm:$0x1]
        %v1844 = vld [vmem:[%s456 + $0xf] sm:$0x1]
        %v1845 = vld [vmem:[%s456 + $0x17] sm:$0x1]
        %v1846 = vld [vmem:[%s456 + $0x1f] sm:$0x1]
        %v1847 = vld [vmem:[%s463 + $0x6] sm:$0x1]
        %v1848 = vld [vmem:[%s463 + $0xe] sm:$0x1]
        %v1849 = vld [vmem:[%s463 + $0x16] sm:$0x1]
        %v1850 = vld [vmem:[%s463 + $0x1e] sm:$0x1]
        %v1851 = vld [vmem:[%s463 + $0x7] sm:$0x1]
        %v1852 = vld [vmem:[%s463 + $0xf] sm:$0x1]
        %v1853 = vld [vmem:[%s463 + $0x17] sm:$0x1]
        %v1854 = vld [vmem:[%s463 + $0x1f] sm:$0x1]
        %v1855 = vld [vmem:[%s535 + $0x6] sm:$0x1]
        %v1856 = vld [vmem:[%s535 + $0xe] sm:$0x1]
        %v1857 = vld [vmem:[%s535 + $0x16] sm:$0x1]
        %v1858 = vld [vmem:[%s535 + $0x1e] sm:$0x1]
        %v1859 = vld [vmem:[%s543 + $0x6] sm:$0x1]
        %v1860 = vld [vmem:[%s543 + $0xe] sm:$0x1]
        %v1861 = vld [vmem:[%s543 + $0x16] sm:$0x1]
        %v1862 = vld [vmem:[%s543 + $0x1e] sm:$0x1]
        %v1867 = vrot.slane %v1840, 7
        %v1868 = vsel %vm591, %v1867, %v1839
        %v1869 = vrot.slane %v1841, 6
        %v1870 = vsel %vm594, %v1869, %v1868
        %v1871 = vrot.slane %v1842, 5
        %v1872 = vsel %vm597, %v1871, %v1870
        %v1878 = vrot.slane %v1847, 4
        %v1879 = vrot.slane %v1848, 3
        %v1880 = vsel %vm606, %v1879, %v1878
        %v1881 = vrot.slane %v1849, 2
        %v1882 = vsel %vm609, %v1881, %v1880
        %v1883 = vrot.slane %v1850, 1
        %v1884 = vsel %vm612, %v1883, %v1882
        %1886 = vrot.lane.b32.xlu0 %v1872, 127
        %v1887 = vpop.permute.xlu0 %1886
        %v1893 = vrot.slane %v1855, 4
        %v1894 = vrot.slane %v1856, 3
        %v1895 = vsel %vm606, %v1894, %v1893
        %v1896 = vrot.slane %v1857, 2
        %v1897 = vsel %vm609, %v1896, %v1895
        %v1898 = vrot.slane %v1858, 1
        %v1899 = vsel %vm612, %v1898, %v1897
        %v1905 = vrot.slane %v1860, 7
        %v1906 = vsel %vm591, %v1905, %v1859
        %v1907 = vrot.slane %v1861, 6
        %v1908 = vsel %vm594, %v1907, %v1906
        %v1909 = vrot.slane %v1862, 5
        %v1910 = vsel %vm597, %v1909, %v1908
        %1912 = vrot.lane.b32.xlu0 %v1899, 127
        %v1913 = vpop.permute.xlu0 %1912
        %v1919 = vrot.slane %v1844, 7
        %v1920 = vsel %vm591, %v1919, %v1843
        %v1921 = vrot.slane %v1845, 6
        %v1922 = vsel %vm594, %v1921, %v1920
        %v1923 = vrot.slane %v1846, 5
        %v1924 = vsel %vm597, %v1923, %v1922
        %v1930 = vrot.slane %v1851, 4
        %v1931 = vrot.slane %v1852, 3
        %v1932 = vsel %vm606, %v1931, %v1930
        %v1933 = vrot.slane %v1853, 2
        %v1934 = vsel %vm609, %v1933, %v1932
        %v1935 = vrot.slane %v1854, 1
        %v1936 = vsel %vm612, %v1935, %v1934
        %1938 = vrot.lane.b32.xlu0 %v1924, 127
        %v1939 = vpop.permute.xlu0 %1938
        %v1940 = vsel %vm669, %v1872, %v1884
        %v1941 = vsel %vm669, %v1887, %v1899
        %v1942 = vsel %vm669, %v1910, %v1913
        %v1943 = vsel %vm669, %v1924, %v1936
        %v1944 = vsel %vm669, %v1939, 0
        %1946 = vmatprep.subr.mxu0 0.0
        %1947 = vmatpush1.msra.mxu0 0.0
        %1948 = vmatprep.subr.mxu0 0.0
        %1949 = vmatpush1.msra.mxu0 0.0
        %1950 = vmatprep.subr.mxu0 0.0
        %1951 = vmatpush1.msra.mxu0 0.0
        %1952 = vmatprep.subr.mxu0 0.0
        %1953 = vmatpush1.msra.mxu0 0.0
        %1954 = vmatprep.subr.mxu0 0.0
        %1955 = vmatpush1.msra.mxu0 0.0
        %1956 = vmatprep.subr.mxu0 0.0
        %1957 = vmatpush1.msra.mxu0 0.0
        %1958 = vmatprep.subr.mxu0 0.0
        %1959 = vmatpush1.msra.mxu0 0.0
        %1960 = vmatprep.subr.mxu0 0.0
        %1961 = vmatpush1.msra.mxu0 0.0
        %1962 = vmatprep.subr.mxu0 0.0
        %1963 = vmatpush1.msra.mxu0 0.0
        %1964 = vmatprep.subr.mxu0 0.0
        %1965 = vmatpush1.msra.mxu0 0.0
        %1966 = vmatprep.subr.mxu0 0.0
        %1967 = vmatpush1.msra.mxu0 0.0
        %1968 = vmatprep.subr.mxu0 0.0
        %1969 = vmatpush1.msra.mxu0 %v1944
        %1970 = vmatprep.subr.mxu0 0.0
        %1971 = vmatpush1.msra.mxu0 %v1943
        %1972 = vmatprep.subr.mxu0 0.0
        %1973 = vmatpush1.msra.mxu0 %v1942
        %1974 = vmatprep.subr.mxu0 0.0
        %1975 = vmatpush1.msra.mxu0 %v1941
        %1976 = vmatprep.subr.mxu0 0.0
        %1977 = vmatpush1.msra.mxu0 %v1940
        %1978 = vmatprep.subr.mxu0 0.0
        %1979 = vmatpush2.msra.mxu0 0.0
        %1980 = vmatprep.subr.mxu0 0.0
        %1981 = vmatpush2.msra.mxu0 0.0
        %1982 = vmatprep.subr.mxu0 0.0
        %1983 = vmatpush2.msra.mxu0 0.0
        %1984 = vmatprep.subr.mxu0 0.0
        %1985 = vmatpush2.msra.mxu0 0.0
        %1986 = vmatprep.subr.mxu0 0.0
        %1987 = vmatpush2.msra.mxu0 0.0
        %1988 = vmatprep.subr.mxu0 0.0
        %1989 = vmatpush2.msra.mxu0 0.0
        %1990 = vmatprep.subr.mxu0 0.0
        %1991 = vmatpush2.msra.mxu0 0.0
        %1992 = vmatprep.subr.mxu0 0.0
        %1993 = vmatpush2.msra.mxu0 0.0
        %1994 = vmatprep.subr.mxu0 0.0
        %1995 = vmatpush2.msra.mxu0 0.0
        %1996 = vmatprep.subr.mxu0 0.0
        %1997 = vmatpush2.msra.mxu0 0.0
        %1998 = vmatprep.subr.mxu0 0.0
        %1999 = vmatpush2.msra.mxu0 0.0
        %2000 = vmatprep.subr.mxu0 0.0
        %2001 = vmatpush2.msra.mxu0 0.0
        %2002 = vmatprep.subr.mxu0 0.0
        %2003 = vmatpush2.msra.mxu0 0.0
        %2004 = vmatprep.subr.mxu0 0.0
        %2005 = vmatpush2.msra.mxu0 0.0
        %2006 = vmatprep.subr.mxu0 0.0
        %2007 = vmatpush2.msra.mxu0 0.0
        %2008 = vmatprep.subr.mxu0 0.0
        %2009 = vmatpush2.msra.mxu0 0.0
        %2010 = vmatprep.mubr.f32.mxu0 0.0
        %2011 = vmatmul.mubr.f32.gmra.mxu0 %v681
        %v2012 = vpop.f32.mrf.mxu0
        %v2013 = vadd.f32 %v677, %v2012
        %v2014 = vpop.f32.mrf.mxu0
        %2015 = vdwg.mxu0
        %v2018 = vunpack.c.l.s4 1966171168
        %v2019 = vunpack.c.0.s8 %v2018
        %v2020 = vlaneseq
        %v2021 = vshrl.u32 %v2020, 7
        %v2022 = vsub.s32 %v2019, %v2021
        %v2023 = vrot.slane %v2013, %v2022
        %v2024 = vcombine.high %v2023, %v2023
        %v2026 = vunpack.c.l.s4 1966171168
        %v2027 = vunpack.c.0.s8 %v2026
        %v2028 = vlaneseq
        %v2029 = vshrl.u32 %v2028, 7
        %v2030 = vsub.s32 %v2027, %v2029
        %v2031 = vrot.slane %v2023, %v2030
        %v2033 = vunpack.c.l.s4 1966171168
        %v2034 = vunpack.c.0.s8 %v2033
        %v2035 = vlaneseq
        %v2036 = vshrl.u32 %v2035, 7
        %v2037 = vsub.s32 %v2034, %v2036
        %v2038 = vrot.slane %v2024, %v2037
        %v2039 = vcombine.high %v2031, %v2031
        %v2040 = vcombine.high %v2038, %v2038
        %2045 = vst.msk [vmem:[%s527 + $0x6] sm:$0x1] %vm784, %v2031
        %2046 = vst.msk [vmem:[%s527 + $0xe] sm:$0x1] %vm784, %v2038
        %2047 = vst.msk [vmem:[%s527 + $0x16] sm:$0x1] %vm784, %v2039
        %2048 = vst.msk [vmem:[%s527 + $0x1e] sm:$0x1] %vm784, %v2040
        %v2049 = vld [vmem:[%s456 + $0x7] sm:$0x1]
        %v2050 = vld [vmem:[%s456 + $0xf] sm:$0x1]
        %v2051 = vld [vmem:[%s456 + $0x17] sm:$0x1]
        %v2052 = vld [vmem:[%s456 + $0x1f] sm:$0x1]
        %v2053 = vld [vmem:[%s463 + $0x7] sm:$0x1]
        %v2054 = vld [vmem:[%s463 + $0xf] sm:$0x1]
        %v2055 = vld [vmem:[%s463 + $0x17] sm:$0x1]
        %v2056 = vld [vmem:[%s463 + $0x1f] sm:$0x1]
        %v2057 = vld [vmem:[%s535 + $0x7] sm:$0x1]
        %v2058 = vld [vmem:[%s535 + $0xf] sm:$0x1]
        %v2059 = vld [vmem:[%s535 + $0x17] sm:$0x1]
        %v2060 = vld [vmem:[%s535 + $0x1f] sm:$0x1]
        %v2061 = vld [vmem:[%s543 + $0x7] sm:$0x1]
        %v2062 = vld [vmem:[%s543 + $0xf] sm:$0x1]
        %v2063 = vld [vmem:[%s543 + $0x17] sm:$0x1]
        %v2064 = vld [vmem:[%s543 + $0x1f] sm:$0x1]
        %v2069 = vrot.slane %v2050, 7
        %v2070 = vsel %vm591, %v2069, %v2049
        %v2071 = vrot.slane %v2051, 6
        %v2072 = vsel %vm594, %v2071, %v2070
        %v2073 = vrot.slane %v2052, 5
        %v2074 = vsel %vm597, %v2073, %v2072
        %v2080 = vrot.slane %v2053, 4
        %v2081 = vrot.slane %v2054, 3
        %v2082 = vsel %vm606, %v2081, %v2080
        %v2083 = vrot.slane %v2055, 2
        %v2084 = vsel %vm609, %v2083, %v2082
        %v2085 = vrot.slane %v2056, 1
        %v2086 = vsel %vm612, %v2085, %v2084
        %2088 = vrot.lane.b32.xlu0 %v2074, 127
        %v2089 = vpop.permute.xlu0 %2088
        %v2095 = vrot.slane %v2057, 4
        %v2096 = vrot.slane %v2058, 3
        %v2097 = vsel %vm606, %v2096, %v2095
        %v2098 = vrot.slane %v2059, 2
        %v2099 = vsel %vm609, %v2098, %v2097
        %v2100 = vrot.slane %v2060, 1
        %v2101 = vsel %vm612, %v2100, %v2099
        %v2107 = vrot.slane %v2062, 7
        %v2108 = vsel %vm591, %v2107, %v2061
        %v2109 = vrot.slane %v2063, 6
        %v2110 = vsel %vm594, %v2109, %v2108
        %v2111 = vrot.slane %v2064, 5
        %v2112 = vsel %vm597, %v2111, %v2110
        %2114 = vrot.lane.b32.xlu0 %v2101, 127
        %v2115 = vpop.permute.xlu0 %2114
        %v2118 = vrot.slane %v561, 4
        %2121 = vrot.lane.b32.xlu0 %v560, 127
        %v2122 = vpop.permute.xlu0 %2121
        %v2123 = vsel %vm669, %v2074, %v2086
        %v2124 = vsel %vm669, %v2089, %v2101
        %v2125 = vsel %vm669, %v2112, %v2115
        %v2126 = vsel %vm669, %v560, %v2118
        %v2127 = vsel %vm669, %v2122, 0
        %2129 = vmatprep.subr.mxu0 0.0
        %2130 = vmatpush1.msra.mxu0 0.0
        %2131 = vmatprep.subr.mxu0 0.0
        %2132 = vmatpush1.msra.mxu0 0.0
        %2133 = vmatprep.subr.mxu0 0.0
        %2134 = vmatpush1.msra.mxu0 0.0
        %2135 = vmatprep.subr.mxu0 0.0
        %2136 = vmatpush1.msra.mxu0 0.0
        %2137 = vmatprep.subr.mxu0 0.0
        %2138 = vmatpush1.msra.mxu0 0.0
        %2139 = vmatprep.subr.mxu0 0.0
        %2140 = vmatpush1.msra.mxu0 0.0
        %2141 = vmatprep.subr.mxu0 0.0
        %2142 = vmatpush1.msra.mxu0 0.0
        %2143 = vmatprep.subr.mxu0 0.0
        %2144 = vmatpush1.msra.mxu0 0.0
        %2145 = vmatprep.subr.mxu0 0.0
        %2146 = vmatpush1.msra.mxu0 0.0
        %2147 = vmatprep.subr.mxu0 0.0
        %2148 = vmatpush1.msra.mxu0 0.0
        %2149 = vmatprep.subr.mxu0 0.0
        %2150 = vmatpush1.msra.mxu0 0.0
        %2151 = vmatprep.subr.mxu0 0.0
        %2152 = vmatpush1.msra.mxu0 %v2127
        %2153 = vmatprep.subr.mxu0 0.0
        %2154 = vmatpush1.msra.mxu0 %v2126
        %2155 = vmatprep.subr.mxu0 0.0
        %2156 = vmatpush1.msra.mxu0 %v2125
        %2157 = vmatprep.subr.mxu0 0.0
        %2158 = vmatpush1.msra.mxu0 %v2124
        %2159 = vmatprep.subr.mxu0 0.0
        %2160 = vmatpush1.msra.mxu0 %v2123
        %2161 = vmatprep.subr.mxu0 0.0
        %2162 = vmatpush2.msra.mxu0 0.0
        %2163 = vmatprep.subr.mxu0 0.0
        %2164 = vmatpush2.msra.mxu0 0.0
        %2165 = vmatprep.subr.mxu0 0.0
        %2166 = vmatpush2.msra.mxu0 0.0
        %2167 = vmatprep.subr.mxu0 0.0
        %2168 = vmatpush2.msra.mxu0 0.0
        %2169 = vmatprep.subr.mxu0 0.0
        %2170 = vmatpush2.msra.mxu0 0.0
        %2171 = vmatprep.subr.mxu0 0.0
        %2172 = vmatpush2.msra.mxu0 0.0
        %2173 = vmatprep.subr.mxu0 0.0
        %2174 = vmatpush2.msra.mxu0 0.0
        %2175 = vmatprep.subr.mxu0 0.0
        %2176 = vmatpush2.msra.mxu0 0.0
        %2177 = vmatprep.subr.mxu0 0.0
        %2178 = vmatpush2.msra.mxu0 0.0
        %2179 = vmatprep.subr.mxu0 0.0
        %2180 = vmatpush2.msra.mxu0 0.0
        %2181 = vmatprep.subr.mxu0 0.0
        %2182 = vmatpush2.msra.mxu0 0.0
        %2183 = vmatprep.subr.mxu0 0.0
        %2184 = vmatpush2.msra.mxu0 0.0
        %2185 = vmatprep.subr.mxu0 0.0
        %2186 = vmatpush2.msra.mxu0 0.0
        %2187 = vmatprep.subr.mxu0 0.0
        %2188 = vmatpush2.msra.mxu0 0.0
        %2189 = vmatprep.subr.mxu0 0.0
        %2190 = vmatpush2.msra.mxu0 0.0
        %2191 = vmatprep.subr.mxu0 0.0
        %2192 = vmatpush2.msra.mxu0 0.0
        %2193 = vmatprep.mubr.f32.mxu0 0.0
        %2194 = vmatmul.mubr.f32.gmra.mxu0 %v681
        %v2195 = vpop.f32.mrf.mxu0
        %v2196 = vadd.f32 %v677, %v2195
        %v2197 = vpop.f32.mrf.mxu0
        %2198 = vdwg.mxu0
        %v2201 = vunpack.c.l.s4 1966171168
        %v2202 = vunpack.c.0.s8 %v2201
        %v2203 = vlaneseq
        %v2204 = vshrl.u32 %v2203, 7
        %v2205 = vsub.s32 %v2202, %v2204
        %v2206 = vrot.slane %v2196, %v2205
        %v2207 = vcombine.high %v2206, %v2206
        %v2209 = vunpack.c.l.s4 1966171168
        %v2210 = vunpack.c.0.s8 %v2209
        %v2211 = vlaneseq
        %v2212 = vshrl.u32 %v2211, 7
        %v2213 = vsub.s32 %v2210, %v2212
        %v2214 = vrot.slane %v2206, %v2213
        %v2216 = vunpack.c.l.s4 1966171168
        %v2217 = vunpack.c.0.s8 %v2216
        %v2218 = vlaneseq
        %v2219 = vshrl.u32 %v2218, 7
        %v2220 = vsub.s32 %v2217, %v2219
        %v2221 = vrot.slane %v2207, %v2220
        %v2222 = vcombine.high %v2214, %v2214
        %v2223 = vcombine.high %v2221, %v2221
        %2228 = vst.msk [vmem:[%s527 + $0x7] sm:$0x1] %vm784, %v2214
        %2229 = vst.msk [vmem:[%s527 + $0xf] sm:$0x1] %vm784, %v2221
        %2230 = vst.msk [vmem:[%s527 + $0x17] sm:$0x1] %vm784, %v2222
        %2231 = vst.msk [vmem:[%s527 + $0x1f] sm:$0x1] %vm784, %v2223
        %s2232 = sand.u32 %s254, 1
        %s2233 = scalar_lea.sflag [#allocation5], %s2232
        %s2234 = sand.u32 %s254, 1
        %s2235 = smul.addr %s2234, 32
        %s2236 = scalar_lea.vmem [#allocation4], %s2235
        // Predicated region
        $region129: #{downsample.1} parent=119 // pred_check
          %p2237 = pneg %p264
        $region130: #{downsample.1} parent=119 // pred_check_branch
          %2239 = sbr.rel (%p2237) target = $region132
        $region131: #{downsample.1} parent=119 // pred_region
          %s2241 = ssub.s32 512, 512
          %2242 = vsyncadd %s2233, %s2241
          %s2243 = smul.addr %s26, 4
          %s2244 = sadd.s32 %s27, %s2243
          %s2245 = smul.addr %s2244, 128
          %s2246 = scalar_lea.hbm %s8, %s2245
          %s2247 = sshll.u32 %s2236, 4
          %s2248 = int_to_ptr.vmem [resolvable:$true] %s2247
          %2253 = dma.vmem_to_hbm [thread:$0]  %s2248, 512, %s2246, %s2233, 128, 128, 8
        $region132: #{downsample.1} parent=119 // pred_fallthru
          _
      $region120: #{downsample.1} parent=5 // pred_fallthru
        _
      %p2254 = scmp.le.s32.totalorder 2, %s17
      // Predicated region
      $region133: #{downsample.1} parent=5 // pred_check
        %p2255 = pneg %p2254
      $region134: #{downsample.1} parent=5 // pred_check_branch
        %2257 = sbr.rel (%p2255) target = $region136
      $region135: #{downsample.1} parent=5 // pred_region
        %s2258 = ssub.s32 %s17, 2
        // Predicated region
        $region137: #{downsample.1} parent=135 // pred_check
          %p2259 = pneg %p270
        $region138: #{downsample.1} parent=135 // pred_check_branch
          %2261 = sbr.rel (%p2259) target = $region140
        $region139: #{downsample.1} parent=135 // pred_region
          %s2262 = sand.u32 %s255, 1
          %s2263 = scalar_lea.sflag [#allocation5], %s2262
          %s2264 = sand.u32 %s255, 1
          %s2265 = smul.addr %s2264, 32
          %s2266 = scalar_lea.vmem [#allocation4], %s2265
          %2267 = dma.done %s2263, 512
        $region140: #{downsample.1} parent=135 // pred_fallthru
          _
      $region136: #{downsample.1} parent=5 // pred_fallthru
        _
    $region6: #{downsample.1} parent=1 // loop_footer
      %s21 = sadd.s32 1, %s17
    $region7: #{downsample.1} parent=1 // loop_footer_branch
      %16 = sbr.rel target = $region3
    $region8: #{downsample.1} parent=1 // loop_exit
      _
    %2268 = vsyncpa [#allocation5], 1
    %s2269 = scalar_lea.sflag [#allocation5], 1
    %2270 = vsyncpa %s2269, 1

</llo_original>
